<compile_context>
chip_gen: v7x
topology: tpu7x:2x2x1
jax: 0.10.0
libtpu: 0.0.40
codegen_flags: <defaults>
</compile_context>

<pallas_src>
import math
import jax
import jax.numpy as jnp
from jax import lax
from jax.experimental import pallas as pl
from jax.experimental.pallas import tpu as pltpu

# ---- model hyper-parameters (small, consistent with the module's structure) ----
B = 2        # batch
L = 8        # sequence length
D = 32       # d_model (embedding_dim)
H = 4        # heads
DK = D // H  # per-head dim
DFF = 64     # feed-forward hidden dim
ROWS = B * L
LN_EPS = 1000000.0        # the (buggy) default eps in the reference LayerNorm
NEG_INF = -1.0e9          # masked_fill value in the reference attention()
SCALE = 1.0 / math.sqrt(DK)


def _layer_norm(v, a, b):
    # torch quirks reproduced: unbiased std (n-1) and eps = 1e6.  Exact divide (cheap; EUP/VALU
    # have slack and this keeps the result bit-close to the torch reference).
    mean = jnp.mean(v, axis=-1, keepdims=True)
    var = jnp.sum((v - mean) ** 2, axis=-1, keepdims=True) * (1.0 / (D - 1))
    return a * (v - mean) / (jnp.sqrt(var) + LN_EPS) + b


def encoder_layer_kernel(x_ref, maskb_ref,
                         ln1a_ref, ln1b_ref, ln2a_ref, ln2b_ref,
                         wqkv_ref, bqkv_ref, wo_ref, bo_ref,
                         w1_ref, b1_ref, w2_ref, b2_ref,
                         o_ref):
    x = x_ref[...]                               # (ROWS, D) = (B*L, D), already flattened

    # -------- sublayer 0: self-attention with residual --------
    h1 = _layer_norm(x, ln1a_ref[...], ln1b_ref[...])

    # fused QKV projection (weights pre-transposed + concatenated, Q pre-scaled by 1/sqrt(dk))
    qkv = jnp.dot(h1, wqkv_ref[...], preferred_element_type=jnp.float32) + bqkv_ref[...]
    q = qkv[:, 0 * D:1 * D]
    k = qkv[:, 1 * D:2 * D]
    v = qkv[:, 2 * D:3 * D]

    # per-(batch, head) attention, with the output projection fused into the head loop:
    # acc_b += (softmax(q_h k_h^T + mask_h) @ v_h) @ Wo[rows h*DK : (h+1)*DK]
    attn_rows = []
    for b in range(B):                           # static unroll over batch x heads
        r0 = b * L
        acc = None
        for hh in range(H):
            c0 = hh * DK
            qh = q[r0:r0 + L, c0:c0 + DK]        # (L, DK)
            kh = k[r0:r0 + L, c0:c0 + DK]
            vh = v[r0:r0 + L, c0:c0 + DK]
            # scores = qh @ kh^T via trans-B contraction (no materialized transpose)
            s = lax.dot_general(qh, kh, (((1,), (1,)), ((), ())),
                                preferred_element_type=jnp.float32)     # (L, L)
            s = s + maskb_ref[hh]                # per-head ref read (tile-aligned, not hoisted)
            s_max = jnp.max(s, axis=-1, keepdims=True)
            e = jnp.exp(s - s_max)
            p = e * pl.reciprocal(jnp.sum(e, axis=-1, keepdims=True), approx=True)
            head_out = jnp.dot(p, vh, preferred_element_type=jnp.float32)       # (L, DK)
            # fuse the output projection: 8-sublane-aligned row block of Wo, MXU is ~idle
            partial = jnp.dot(head_out, wo_ref[c0:c0 + DK, :],
                              preferred_element_type=jnp.float32)               # (L, D)
            acc = partial if acc is None else acc + partial
        attn_rows.append(acc)
    attn_out = jnp.concatenate(attn_rows, axis=0) + bo_ref[...]        # (ROWS, D)
    x1 = x + attn_out                            # residual (dropout == identity)

    # -------- sublayer 1: feed-forward with residual --------
    h2 = _layer_norm(x1, ln2a_ref[...], ln2b_ref[...])
    ffh = jnp.maximum(
        jnp.dot(h2, w1_ref[...], preferred_element_type=jnp.float32) + b1_ref[...], 0.0)
    ff_out = jnp.dot(ffh, w2_ref[...], preferred_element_type=jnp.float32) + b2_ref[...]

    # single contiguous full-block store
    o_ref[...] = x1 + ff_out


def prepare_encoder_params(params, mask):
    """One-time parameter preparation (call once at setup, NOT per forward call):
       - fuse Q/K/V into a single (D, 3D) projection with 1/sqrt(dk) folded into Q and bq,
       - turn the 0/1 mask into an additive -1e9 bias."""
    wqkv = jnp.concatenate(
        [params["wq_t"] * SCALE, params["wk_t"], params["wv_t"]], axis=1)          # (D, 3D)
    bqkv = jnp.concatenate(
        [params["bq"] * SCALE, params["bk"], params["bv"]], axis=1)                # (1, 3D)
    mask_bias = jnp.where(mask == 0, NEG_INF, 0.0).astype(jnp.float32)             # (H, L, L)
    return {
        "wqkv": wqkv, "bqkv": bqkv, "mask_bias": mask_bias,
        "ln1_a": params["ln1_a"], "ln1_b": params["ln1_b"],
        "ln2_a": params["ln2_a"], "ln2_b": params["ln2_b"],
        "wo_t": params["wo_t"], "bo": params["bo"],
        "w1_t": params["w1_t"], "b1": params["b1"],
        "w2_t": params["w2_t"], "b2": params["b2"],
    }


def encoder_layer_pallas(x, prep):
    """x: (B, L, D) f32, prep: output of prepare_encoder_params."""
    # Flatten batch/seq in the wrapper (metadata-only in XLA) -> no in-kernel reshapes, and the
    # whole batch runs in ONE grid step on every generation (the kernel is overhead-bound; a
    # per-core grid split only duplicates weights/mask into both cores' VMEM).
    x2 = x.reshape(ROWS, D)

    full = lambda shape: pl.BlockSpec(shape, lambda i: (0,) * len(shape))

    in_specs = [
        full((ROWS, D)),                                # x (flattened)
        full((H, L, L)),                                # additive mask bias
        full((1, D)), full((1, D)),                     # ln1 a/b
        full((1, D)), full((1, D)),                     # ln2 a/b
        full((D, 3 * D)), full((1, 3 * D)),             # fused Wqkv^T (Q pre-scaled), bqkv
        full((D, D)), full((1, D)),                     # Wo^T, bo
        full((D, DFF)), full((1, DFF)),                 # W1^T, b1
        full((DFF, D)), full((1, D)),                   # W2^T, b2
    ]

    out = pl.pallas_call(
        encoder_layer_kernel,
        out_shape=jax.ShapeDtypeStruct((ROWS, D), jnp.float32),
        grid_spec=pltpu.PrefetchScalarGridSpec(
            num_scalar_prefetch=0,
            grid=(1,),
            in_specs=in_specs,
            out_specs=full((ROWS, D)),
            scratch_shapes=[],                           # attn scratch eliminated
        ),
        compiler_params=pltpu.CompilerParams(dimension_semantics=("arbitrary",)),
    )(
        x2, prep["mask_bias"],
        prep["ln1_a"], prep["ln1_b"], prep["ln2_a"], prep["ln2_b"],
        prep["wqkv"], prep["bqkv"], prep["wo_t"], prep["bo"],
        prep["w1_t"], prep["b1"], prep["w2_t"], prep["b2"],
    )
    return out.reshape(B, L, D)


# ---------------- pure-JAX reference (mirrors the PyTorch module) ----------------
def encoder_layer_ref(x, mask, p):
    def ln(v, a, b):
        mean = jnp.mean(v, axis=-1, keepdims=True)
        var = jnp.sum((v - mean) ** 2, axis=-1, keepdims=True) / (v.shape[-1] - 1)
        return a[0] * (v - mean) / (jnp.sqrt(var) + LN_EPS) + b[0]

    h1 = ln(x, p["ln1_a"], p["ln1_b"])
    q = h1 @ p["wq_t"] + p["bq"][0]
    k = h1 @ p["wk_t"] + p["bk"][0]
    v = h1 @ p["wv_t"] + p["bv"][0]

    def split(t):   # (B, L, D) -> (B, H, L, DK)
        return t.reshape(B, L, H, DK).transpose(0, 2, 1, 3)

    qh, kh, vh = split(q), split(k), split(v)
    s = jnp.einsum("bhld,bhmd->bhlm", qh, kh / math.sqrt(DK))     # reference scales k
    s = jnp.where(mask[None] == 0, NEG_INF, s)                    # masked_fill semantics
    pattn = jax.nn.softmax(s, axis=-1)
    a = jnp.einsum("bhlm,bhmd->bhld", pattn, vh).transpose(0, 2, 1, 3).reshape(B, L, D)
    x1 = x + (a @ p["wo_t"] + p["bo"][0])

    h2 = ln(x1, p["ln2_a"], p["ln2_b"])
    ff = jnp.maximum(h2 @ p["w1_t"] + p["b1"][0], 0.0) @ p["w2_t"] + p["b2"][0]
    return x1 + ff


def make_params(key):
    ks = jax.random.split(key, 12)
    n = lambda k, shape, s=0.1: (s * jax.random.normal(k, shape)).astype(jnp.float32)
    return {
        "ln1_a": jnp.ones((1, D), jnp.float32), "ln1_b": jnp.zeros((1, D), jnp.float32),
        "ln2_a": jnp.ones((1, D), jnp.float32), "ln2_b": jnp.zeros((1, D), jnp.float32),
        # stored already transposed: (in, out)
        "wq_t": n(ks[0], (D, D)),   "bq": n(ks[1], (1, D), 0.05),
        "wk_t": n(ks[2], (D, D)),   "bk": n(ks[3], (1, D), 0.05),
        "wv_t": n(ks[4], (D, D)),   "bv": n(ks[5], (1, D), 0.05),
        "wo_t": n(ks[6], (D, D)),   "bo": n(ks[7], (1, D), 0.05),
        "w1_t": n(ks[8], (D, DFF)), "b1": n(ks[9], (1, DFF), 0.05),
        "w2_t": n(ks[10], (DFF, D)), "b2": n(ks[11], (1, D), 0.05),
    }


if __name__ == "__main__":
    key = jax.random.PRNGKey(0)
    kx, kp = jax.random.split(key)
    x = jax.random.normal(kx, (B, L, D), dtype=jnp.float32)
    # deterministic mask: lower-triangular (causal-like), broadcast over heads, float32.
    # (guarantees the diagonal is unmasked, so no all-masked softmax row exists)
    tril = jnp.tril(jnp.ones((L, L), jnp.float32))
    mask = jnp.broadcast_to(tril, (H, L, L)).astype(jnp.float32)

    params = make_params(kp)
    prep = prepare_encoder_params(params, mask)   # one-time weight fusion / scale folding

    out = encoder_layer_pallas(x, prep)
    out = jax.block_until_ready(out)

    ref = encoder_layer_ref(x, mask, params)
    assert out.shape == (B, L, D)
    # tolerance accommodates the EUP approx-reciprocal in the softmax denominator (the only
    # remaining approximation; LayerNorm now uses an exact divide).
    assert jnp.allclose(out, ref, rtol=2e-3, atol=2e-3), "Pallas output mismatch vs JAX reference"

    print("KERNEL_OK")
</pallas_src>

<mosaic_0001>
module attributes {stable_mosaic.version = 11 : i64} {
  func.func @encoder_layer_kernel(%arg0: i32, %arg1: memref<16x32xf32, #tpu.memory_space<vmem>>, %arg2: memref<4x8x8xf32, #tpu.memory_space<vmem>>, %arg3: memref<1x32xf32, #tpu.memory_space<vmem>>, %arg4: memref<1x32xf32, #tpu.memory_space<vmem>>, %arg5: memref<1x32xf32, #tpu.memory_space<vmem>>, %arg6: memref<1x32xf32, #tpu.memory_space<vmem>>, %arg7: memref<32x96xf32, #tpu.memory_space<vmem>>, %arg8: memref<1x96xf32, #tpu.memory_space<vmem>>, %arg9: memref<32x32xf32, #tpu.memory_space<vmem>>, %arg10: memref<1x32xf32, #tpu.memory_space<vmem>>, %arg11: memref<32x64xf32, #tpu.memory_space<vmem>>, %arg12: memref<1x64xf32, #tpu.memory_space<vmem>>, %arg13: memref<64x32xf32, #tpu.memory_space<vmem>>, %arg14: memref<1x32xf32, #tpu.memory_space<vmem>>, %arg15: memref<16x32xf32, #tpu.memory_space<vmem>>) attributes {dimension_semantics = [#tpu.dimension_semantics<arbitrary>], iteration_bounds = array<i64: 1>, scalar_prefetch = 0 : i64, scratch_operands = 0 : i64, tpu.core_type = #tpu.core_type<tc>, window_params = [{pipeline_mode = #tpu.pipeline_mode<synchronous>, transform_indices = @transform_0, window_bounds = array<i64: 16, 32>}, {pipeline_mode = #tpu.pipeline_mode<synchronous>, transform_indices = @transform_1, window_bounds = array<i64: 4, 8, 8>}, {pipeline_mode = #tpu.pipeline_mode<synchronous>, transform_indices = @transform_2, window_bounds = array<i64: 1, 32>}, {pipeline_mode = #tpu.pipeline_mode<synchronous>, transform_indices = @transform_3, window_bounds = array<i64: 1, 32>}, {pipeline_mode = #tpu.pipeline_mode<synchronous>, transform_indices = @transform_4, window_bounds = array<i64: 1, 32>}, {pipeline_mode = #tpu.pipeline_mode<synchronous>, transform_indices = @transform_5, window_bounds = array<i64: 1, 32>}, {pipeline_mode = #tpu.pipeline_mode<synchronous>, transform_indices = @transform_6, window_bounds = array<i64: 32, 96>}, {pipeline_mode = #tpu.pipeline_mode<synchronous>, transform_indices = @transform_7, window_bounds = array<i64: 1, 96>}, {pipeline_mode = #tpu.pipeline_mode<synchronous>, transform_indices = @transform_8, window_bounds = array<i64: 32, 32>}, {pipeline_mode = #tpu.pipeline_mode<synchronous>, transform_indices = @transform_9, window_bounds = array<i64: 1, 32>}, {pipeline_mode = #tpu.pipeline_mode<synchronous>, transform_indices = @transform_10, window_bounds = array<i64: 32, 64>}, {pipeline_mode = #tpu.pipeline_mode<synchronous>, transform_indices = @transform_11, window_bounds = array<i64: 1, 64>}, {pipeline_mode = #tpu.pipeline_mode<synchronous>, transform_indices = @transform_12, window_bounds = array<i64: 64, 32>}, {pipeline_mode = #tpu.pipeline_mode<synchronous>, transform_indices = @transform_13, window_bounds = array<i64: 1, 32>}, {pipeline_mode = #tpu.pipeline_mode<synchronous>, transform_indices = @transform_14, window_bounds = array<i64: 16, 32>}]} {
    %c0 = arith.constant 0 : index
    %c0_0 = arith.constant 0 : index
    %0 = vector.load %arg1[%c0, %c0_0] : memref<16x32xf32, #tpu.memory_space<vmem>>, vector<16x32xf32>
    %c0_1 = arith.constant 0 : index
    %c0_2 = arith.constant 0 : index
    %1 = vector.load %arg3[%c0_1, %c0_2] : memref<1x32xf32, #tpu.memory_space<vmem>>, vector<1x32xf32>
    %c0_3 = arith.constant 0 : index
    %c0_4 = arith.constant 0 : index
    %2 = vector.load %arg4[%c0_3, %c0_4] : memref<1x32xf32, #tpu.memory_space<vmem>>, vector<1x32xf32>
    %cst = arith.constant dense<0.000000e+00> : vector<16xf32>
    %3 = vector.multi_reduction <add>, %0, %cst [1] : vector<16x32xf32> to vector<16xf32>
    %4 = vector.shape_cast %3 : vector<16xf32> to vector<16x1xf32>
    %cst_5 = arith.constant 3.200000e+01 : f32
    %5 = vector.broadcast %cst_5 : f32 to vector<16x1xf32>
    %6 = arith.divf %4, %5 : vector<16x1xf32>
    %7 = vector.broadcast %6 : vector<16x1xf32> to vector<16x32xf32>
    %8 = arith.subf %0, %7 : vector<16x32xf32>
    %9 = arith.mulf %8, %8 : vector<16x32xf32>
    %cst_6 = arith.constant dense<0.000000e+00> : vector<16xf32>
    %10 = vector.multi_reduction <add>, %9, %cst_6 [1] : vector<16x32xf32> to vector<16xf32>
    %11 = vector.shape_cast %10 : vector<16xf32> to vector<16x1xf32>
    %cst_7 = arith.constant 0.0322580636 : f32
    %12 = vector.broadcast %cst_7 : f32 to vector<16x1xf32>
    %13 = arith.mulf %11, %12 : vector<16x1xf32>
    %14 = vector.broadcast %6 : vector<16x1xf32> to vector<16x32xf32>
    %15 = arith.subf %0, %14 : vector<16x32xf32>
    %16 = vector.broadcast %1 : vector<1x32xf32> to vector<16x32xf32>
    %17 = arith.mulf %16, %15 : vector<16x32xf32>
    %18 = math.sqrt %13 : vector<16x1xf32>
    %cst_8 = arith.constant 1.000000e+06 : f32
    %19 = vector.broadcast %cst_8 : f32 to vector<16x1xf32>
    %20 = arith.addf %18, %19 : vector<16x1xf32>
    %21 = vector.broadcast %20 : vector<16x1xf32> to vector<16x32xf32>
    %22 = arith.divf %17, %21 : vector<16x32xf32>
    %23 = vector.broadcast %2 : vector<1x32xf32> to vector<16x32xf32>
    %24 = arith.addf %22, %23 : vector<16x32xf32>
    %c0_9 = arith.constant 0 : index
    %c0_10 = arith.constant 0 : index
    %25 = vector.load %arg7[%c0_9, %c0_10] : memref<32x96xf32, #tpu.memory_space<vmem>>, vector<32x96xf32>
    %cst_11 = arith.constant dense<0.000000e+00> : vector<16x96xf32>
    %26 = tpu.matmul %24, %25, %cst_11 {dimension_numbers = #tpu.dot_dimension_numbers<[1], [0], [0], [1], [0, 0, 1, 1], [], []>} : vector<16x32xf32>, vector<32x96xf32>, vector<16x96xf32> -> vector<16x96xf32>
    %c0_12 = arith.constant 0 : index
    %c0_13 = arith.constant 0 : index
    %27 = vector.load %arg8[%c0_12, %c0_13] : memref<1x96xf32, #tpu.memory_space<vmem>>, vector<1x96xf32>
    %28 = vector.broadcast %27 : vector<1x96xf32> to vector<16x96xf32>
    %29 = arith.addf %26, %28 : vector<16x96xf32>
    %30 = vector.extract_strided_slice %29 {offsets = [0, 0], sizes = [16, 32], strides = [1, 1]} : vector<16x96xf32> to vector<16x32xf32>
    %31 = vector.extract_strided_slice %29 {offsets = [0, 32], sizes = [16, 32], strides = [1, 1]} : vector<16x96xf32> to vector<16x32xf32>
    %32 = vector.extract_strided_slice %29 {offsets = [0, 64], sizes = [16, 32], strides = [1, 1]} : vector<16x96xf32> to vector<16x32xf32>
    %33 = vector.extract_strided_slice %30 {offsets = [0, 0], sizes = [8, 8], strides = [1, 1]} : vector<16x32xf32> to vector<8x8xf32>
    %34 = vector.extract_strided_slice %31 {offsets = [0, 0], sizes = [8, 8], strides = [1, 1]} : vector<16x32xf32> to vector<8x8xf32>
    %35 = vector.extract_strided_slice %32 {offsets = [0, 0], sizes = [8, 8], strides = [1, 1]} : vector<16x32xf32> to vector<8x8xf32>
    %cst_14 = arith.constant dense<0.000000e+00> : vector<8x8xf32>
    %36 = tpu.matmul %33, %34, %cst_14 {dimension_numbers = #tpu.dot_dimension_numbers<[1], [1], [0], [0], [0, 0, 1, 0], [], []>} : vector<8x8xf32>, vector<8x8xf32>, vector<8x8xf32> -> vector<8x8xf32>
    %c0_15 = arith.constant 0 : index
    %c0_16 = arith.constant 0 : index
    %c0_17 = arith.constant 0 : index
    %37 = vector.load %arg2[%c0_15, %c0_16, %c0_17] : memref<4x8x8xf32, #tpu.memory_space<vmem>>, vector<1x8x8xf32>
    %38 = vector.shape_cast %37 : vector<1x8x8xf32> to vector<8x8xf32>
    %39 = arith.addf %36, %38 : vector<8x8xf32>
    %cst_18 = arith.constant dense<0xFF800000> : vector<8xf32>
    %40 = vector.multi_reduction <maximumf>, %39, %cst_18 [1] : vector<8x8xf32> to vector<8xf32>
    %41 = vector.shape_cast %40 : vector<8xf32> to vector<8x1xf32>
    %42 = vector.broadcast %41 : vector<8x1xf32> to vector<8x8xf32>
    %43 = arith.subf %39, %42 : vector<8x8xf32>
    %44 = math.exp %43 : vector<8x8xf32>
    %cst_19 = arith.constant dense<0.000000e+00> : vector<8xf32>
    %45 = vector.multi_reduction <add>, %44, %cst_19 [1] : vector<8x8xf32> to vector<8xf32>
    %46 = vector.shape_cast %45 : vector<8xf32> to vector<8x1xf32>
    %47 = tpu.reciprocal %46 {approx = true} : vector<8x1xf32> -> vector<8x1xf32>
    %48 = vector.broadcast %47 : vector<8x1xf32> to vector<8x8xf32>
    %49 = arith.mulf %44, %48 : vector<8x8xf32>
    %cst_20 = arith.constant dense<0.000000e+00> : vector<8x8xf32>
    %50 = tpu.matmul %49, %35, %cst_20 {dimension_numbers = #tpu.dot_dimension_numbers<[1], [0], [0], [1], [0, 0, 1, 1], [], []>} : vector<8x8xf32>, vector<8x8xf32>, vector<8x8xf32> -> vector<8x8xf32>
    %c0_21 = arith.constant 0 : index
    %c0_22 = arith.constant 0 : index
    %51 = vector.load %arg9[%c0_21, %c0_22] : memref<32x32xf32, #tpu.memory_space<vmem>>, vector<8x32xf32>
    %cst_23 = arith.constant dense<0.000000e+00> : vector<8x32xf32>
    %52 = tpu.matmul %50, %51, %cst_23 {dimension_numbers = #tpu.dot_dimension_numbers<[1], [0], [0], [1], [0, 0, 1, 1], [], []>} : vector<8x8xf32>, vector<8x32xf32>, vector<8x32xf32> -> vector<8x32xf32>
    %53 = vector.extract_strided_slice %30 {offsets = [0, 8], sizes = [8, 8], strides = [1, 1]} : vector<16x32xf32> to vector<8x8xf32>
    %54 = vector.extract_strided_slice %31 {offsets = [0, 8], sizes = [8, 8], strides = [1, 1]} : vector<16x32xf32> to vector<8x8xf32>
    %55 = vector.extract_strided_slice %32 {offsets = [0, 8], sizes = [8, 8], strides = [1, 1]} : vector<16x32xf32> to vector<8x8xf32>
    %cst_24 = arith.constant dense<0.000000e+00> : vector<8x8xf32>
    %56 = tpu.matmul %53, %54, %cst_24 {dimension_numbers = #tpu.dot_dimension_numbers<[1], [1], [0], [0], [0, 0, 1, 0], [], []>} : vector<8x8xf32>, vector<8x8xf32>, vector<8x8xf32> -> vector<8x8xf32>
    %c1 = arith.constant 1 : index
    %c0_25 = arith.constant 0 : index
    %c0_26 = arith.constant 0 : index
    %57 = vector.load %arg2[%c1, %c0_25, %c0_26] : memref<4x8x8xf32, #tpu.memory_space<vmem>>, vector<1x8x8xf32>
    %58 = vector.shape_cast %57 : vector<1x8x8xf32> to vector<8x8xf32>
    %59 = arith.addf %56, %58 : vector<8x8xf32>
    %cst_27 = arith.constant dense<0xFF800000> : vector<8xf32>
    %60 = vector.multi_reduction <maximumf>, %59, %cst_27 [1] : vector<8x8xf32> to vector<8xf32>
    %61 = vector.shape_cast %60 : vector<8xf32> to vector<8x1xf32>
    %62 = vector.broadcast %61 : vector<8x1xf32> to vector<8x8xf32>
    %63 = arith.subf %59, %62 : vector<8x8xf32>
    %64 = math.exp %63 : vector<8x8xf32>
    %cst_28 = arith.constant dense<0.000000e+00> : vector<8xf32>
    %65 = vector.multi_reduction <add>, %64, %cst_28 [1] : vector<8x8xf32> to vector<8xf32>
    %66 = vector.shape_cast %65 : vector<8xf32> to vector<8x1xf32>
    %67 = tpu.reciprocal %66 {approx = true} : vector<8x1xf32> -> vector<8x1xf32>
    %68 = vector.broadcast %67 : vector<8x1xf32> to vector<8x8xf32>
    %69 = arith.mulf %64, %68 : vector<8x8xf32>
    %cst_29 = arith.constant dense<0.000000e+00> : vector<8x8xf32>
    %70 = tpu.matmul %69, %55, %cst_29 {dimension_numbers = #tpu.dot_dimension_numbers<[1], [0], [0], [1], [0, 0, 1, 1], [], []>} : vector<8x8xf32>, vector<8x8xf32>, vector<8x8xf32> -> vector<8x8xf32>
    %c8 = arith.constant 8 : index
    %c0_30 = arith.constant 0 : index
    %71 = vector.load %arg9[%c8, %c0_30] : memref<32x32xf32, #tpu.memory_space<vmem>>, vector<8x32xf32>
    %cst_31 = arith.constant dense<0.000000e+00> : vector<8x32xf32>
    %72 = tpu.matmul %70, %71, %cst_31 {dimension_numbers = #tpu.dot_dimension_numbers<[1], [0], [0], [1], [0, 0, 1, 1], [], []>} : vector<8x8xf32>, vector<8x32xf32>, vector<8x32xf32> -> vector<8x32xf32>
    %73 = arith.addf %52, %72 : vector<8x32xf32>
    %74 = vector.extract_strided_slice %30 {offsets = [0, 16], sizes = [8, 8], strides = [1, 1]} : vector<16x32xf32> to vector<8x8xf32>
    %75 = vector.extract_strided_slice %31 {offsets = [0, 16], sizes = [8, 8], strides = [1, 1]} : vector<16x32xf32> to vector<8x8xf32>
    %76 = vector.extract_strided_slice %32 {offsets = [0, 16], sizes = [8, 8], strides = [1, 1]} : vector<16x32xf32> to vector<8x8xf32>
    %cst_32 = arith.constant dense<0.000000e+00> : vector<8x8xf32>
    %77 = tpu.matmul %74, %75, %cst_32 {dimension_numbers = #tpu.dot_dimension_numbers<[1], [1], [0], [0], [0, 0, 1, 0], [], []>} : vector<8x8xf32>, vector<8x8xf32>, vector<8x8xf32> -> vector<8x8xf32>
    %c2 = arith.constant 2 : index
    %c0_33 = arith.constant 0 : index
    %c0_34 = arith.constant 0 : index
    %78 = vector.load %arg2[%c2, %c0_33, %c0_34] : memref<4x8x8xf32, #tpu.memory_space<vmem>>, vector<1x8x8xf32>
    %79 = vector.shape_cast %78 : vector<1x8x8xf32> to vector<8x8xf32>
    %80 = arith.addf %77, %79 : vector<8x8xf32>
    %cst_35 = arith.constant dense<0xFF800000> : vector<8xf32>
    %81 = vector.multi_reduction <maximumf>, %80, %cst_35 [1] : vector<8x8xf32> to vector<8xf32>
    %82 = vector.shape_cast %81 : vector<8xf32> to vector<8x1xf32>
    %83 = vector.broadcast %82 : vector<8x1xf32> to vector<8x8xf32>
    %84 = arith.subf %80, %83 : vector<8x8xf32>
    %85 = math.exp %84 : vector<8x8xf32>
    %cst_36 = arith.constant dense<0.000000e+00> : vector<8xf32>
    %86 = vector.multi_reduction <add>, %85, %cst_36 [1] : vector<8x8xf32> to vector<8xf32>
    %87 = vector.shape_cast %86 : vector<8xf32> to vector<8x1xf32>
    %88 = tpu.reciprocal %87 {approx = true} : vector<8x1xf32> -> vector<8x1xf32>
    %89 = vector.broadcast %88 : vector<8x1xf32> to vector<8x8xf32>
    %90 = arith.mulf %85, %89 : vector<8x8xf32>
    %cst_37 = arith.constant dense<0.000000e+00> : vector<8x8xf32>
    %91 = tpu.matmul %90, %76, %cst_37 {dimension_numbers = #tpu.dot_dimension_numbers<[1], [0], [0], [1], [0, 0, 1, 1], [], []>} : vector<8x8xf32>, vector<8x8xf32>, vector<8x8xf32> -> vector<8x8xf32>
    %c16 = arith.constant 16 : index
    %c0_38 = arith.constant 0 : index
    %92 = vector.load %arg9[%c16, %c0_38] : memref<32x32xf32, #tpu.memory_space<vmem>>, vector<8x32xf32>
    %cst_39 = arith.constant dense<0.000000e+00> : vector<8x32xf32>
    %93 = tpu.matmul %91, %92, %cst_39 {dimension_numbers = #tpu.dot_dimension_numbers<[1], [0], [0], [1], [0, 0, 1, 1], [], []>} : vector<8x8xf32>, vector<8x32xf32>, vector<8x32xf32> -> vector<8x32xf32>
    %94 = arith.addf %73, %93 : vector<8x32xf32>
    %95 = vector.extract_strided_slice %30 {offsets = [0, 24], sizes = [8, 8], strides = [1, 1]} : vector<16x32xf32> to vector<8x8xf32>
    %96 = vector.extract_strided_slice %31 {offsets = [0, 24], sizes = [8, 8], strides = [1, 1]} : vector<16x32xf32> to vector<8x8xf32>
    %97 = vector.extract_strided_slice %32 {offsets = [0, 24], sizes = [8, 8], strides = [1, 1]} : vector<16x32xf32> to vector<8x8xf32>
    %cst_40 = arith.constant dense<0.000000e+00> : vector<8x8xf32>
    %98 = tpu.matmul %95, %96, %cst_40 {dimension_numbers = #tpu.dot_dimension_numbers<[1], [1], [0], [0], [0, 0, 1, 0], [], []>} : vector<8x8xf32>, vector<8x8xf32>, vector<8x8xf32> -> vector<8x8xf32>
    %c3 = arith.constant 3 : index
    %c0_41 = arith.constant 0 : index
    %c0_42 = arith.constant 0 : index
    %99 = vector.load %arg2[%c3, %c0_41, %c0_42] : memref<4x8x8xf32, #tpu.memory_space<vmem>>, vector<1x8x8xf32>
    %100 = vector.shape_cast %99 : vector<1x8x8xf32> to vector<8x8xf32>
    %101 = arith.addf %98, %100 : vector<8x8xf32>
    %cst_43 = arith.constant dense<0xFF800000> : vector<8xf32>
    %102 = vector.multi_reduction <maximumf>, %101, %cst_43 [1] : vector<8x8xf32> to vector<8xf32>
    %103 = vector.shape_cast %102 : vector<8xf32> to vector<8x1xf32>
    %104 = vector.broadcast %103 : vector<8x1xf32> to vector<8x8xf32>
    %105 = arith.subf %101, %104 : vector<8x8xf32>
    %106 = math.exp %105 : vector<8x8xf32>
    %cst_44 = arith.constant dense<0.000000e+00> : vector<8xf32>
    %107 = vector.multi_reduction <add>, %106, %cst_44 [1] : vector<8x8xf32> to vector<8xf32>
    %108 = vector.shape_cast %107 : vector<8xf32> to vector<8x1xf32>
    %109 = tpu.reciprocal %108 {approx = true} : vector<8x1xf32> -> vector<8x1xf32>
    %110 = vector.broadcast %109 : vector<8x1xf32> to vector<8x8xf32>
    %111 = arith.mulf %106, %110 : vector<8x8xf32>
    %cst_45 = arith.constant dense<0.000000e+00> : vector<8x8xf32>
    %112 = tpu.matmul %111, %97, %cst_45 {dimension_numbers = #tpu.dot_dimension_numbers<[1], [0], [0], [1], [0, 0, 1, 1], [], []>} : vector<8x8xf32>, vector<8x8xf32>, vector<8x8xf32> -> vector<8x8xf32>
    %c24 = arith.constant 24 : index
    %c0_46 = arith.constant 0 : index
    %113 = vector.load %arg9[%c24, %c0_46] : memref<32x32xf32, #tpu.memory_space<vmem>>, vector<8x32xf32>
    %cst_47 = arith.constant dense<0.000000e+00> : vector<8x32xf32>
    %114 = tpu.matmul %112, %113, %cst_47 {dimension_numbers = #tpu.dot_dimension_numbers<[1], [0], [0], [1], [0, 0, 1, 1], [], []>} : vector<8x8xf32>, vector<8x32xf32>, vector<8x32xf32> -> vector<8x32xf32>
    %115 = arith.addf %94, %114 : vector<8x32xf32>
    %116 = vector.extract_strided_slice %30 {offsets = [8, 0], sizes = [8, 8], strides = [1, 1]} : vector<16x32xf32> to vector<8x8xf32>
    %117 = vector.extract_strided_slice %31 {offsets = [8, 0], sizes = [8, 8], strides = [1, 1]} : vector<16x32xf32> to vector<8x8xf32>
    %118 = vector.extract_strided_slice %32 {offsets = [8, 0], sizes = [8, 8], strides = [1, 1]} : vector<16x32xf32> to vector<8x8xf32>
    %cst_48 = arith.constant dense<0.000000e+00> : vector<8x8xf32>
    %119 = tpu.matmul %116, %117, %cst_48 {dimension_numbers = #tpu.dot_dimension_numbers<[1], [1], [0], [0], [0, 0, 1, 0], [], []>} : vector<8x8xf32>, vector<8x8xf32>, vector<8x8xf32> -> vector<8x8xf32>
    %c0_49 = arith.constant 0 : index
    %c0_50 = arith.constant 0 : index
    %c0_51 = arith.constant 0 : index
    %120 = vector.load %arg2[%c0_49, %c0_50, %c0_51] : memref<4x8x8xf32, #tpu.memory_space<vmem>>, vector<1x8x8xf32>
    %121 = vector.shape_cast %120 : vector<1x8x8xf32> to vector<8x8xf32>
    %122 = arith.addf %119, %121 : vector<8x8xf32>
    %cst_52 = arith.constant dense<0xFF800000> : vector<8xf32>
    %123 = vector.multi_reduction <maximumf>, %122, %cst_52 [1] : vector<8x8xf32> to vector<8xf32>
    %124 = vector.shape_cast %123 : vector<8xf32> to vector<8x1xf32>
    %125 = vector.broadcast %124 : vector<8x1xf32> to vector<8x8xf32>
    %126 = arith.subf %122, %125 : vector<8x8xf32>
    %127 = math.exp %126 : vector<8x8xf32>
    %cst_53 = arith.constant dense<0.000000e+00> : vector<8xf32>
    %128 = vector.multi_reduction <add>, %127, %cst_53 [1] : vector<8x8xf32> to vector<8xf32>
    %129 = vector.shape_cast %128 : vector<8xf32> to vector<8x1xf32>
    %130 = tpu.reciprocal %129 {approx = true} : vector<8x1xf32> -> vector<8x1xf32>
    %131 = vector.broadcast %130 : vector<8x1xf32> to vector<8x8xf32>
    %132 = arith.mulf %127, %131 : vector<8x8xf32>
    %cst_54 = arith.constant dense<0.000000e+00> : vector<8x8xf32>
    %133 = tpu.matmul %132, %118, %cst_54 {dimension_numbers = #tpu.dot_dimension_numbers<[1], [0], [0], [1], [0, 0, 1, 1], [], []>} : vector<8x8xf32>, vector<8x8xf32>, vector<8x8xf32> -> vector<8x8xf32>
    %c0_55 = arith.constant 0 : index
    %c0_56 = arith.constant 0 : index
    %134 = vector.load %arg9[%c0_55, %c0_56] : memref<32x32xf32, #tpu.memory_space<vmem>>, vector<8x32xf32>
    %cst_57 = arith.constant dense<0.000000e+00> : vector<8x32xf32>
    %135 = tpu.matmul %133, %134, %cst_57 {dimension_numbers = #tpu.dot_dimension_numbers<[1], [0], [0], [1], [0, 0, 1, 1], [], []>} : vector<8x8xf32>, vector<8x32xf32>, vector<8x32xf32> -> vector<8x32xf32>
    %136 = vector.extract_strided_slice %30 {offsets = [8, 8], sizes = [8, 8], strides = [1, 1]} : vector<16x32xf32> to vector<8x8xf32>
    %137 = vector.extract_strided_slice %31 {offsets = [8, 8], sizes = [8, 8], strides = [1, 1]} : vector<16x32xf32> to vector<8x8xf32>
    %138 = vector.extract_strided_slice %32 {offsets = [8, 8], sizes = [8, 8], strides = [1, 1]} : vector<16x32xf32> to vector<8x8xf32>
    %cst_58 = arith.constant dense<0.000000e+00> : vector<8x8xf32>
    %139 = tpu.matmul %136, %137, %cst_58 {dimension_numbers = #tpu.dot_dimension_numbers<[1], [1], [0], [0], [0, 0, 1, 0], [], []>} : vector<8x8xf32>, vector<8x8xf32>, vector<8x8xf32> -> vector<8x8xf32>
    %c1_59 = arith.constant 1 : index
    %c0_60 = arith.constant 0 : index
    %c0_61 = arith.constant 0 : index
    %140 = vector.load %arg2[%c1_59, %c0_60, %c0_61] : memref<4x8x8xf32, #tpu.memory_space<vmem>>, vector<1x8x8xf32>
    %141 = vector.shape_cast %140 : vector<1x8x8xf32> to vector<8x8xf32>
    %142 = arith.addf %139, %141 : vector<8x8xf32>
    %cst_62 = arith.constant dense<0xFF800000> : vector<8xf32>
    %143 = vector.multi_reduction <maximumf>, %142, %cst_62 [1] : vector<8x8xf32> to vector<8xf32>
    %144 = vector.shape_cast %143 : vector<8xf32> to vector<8x1xf32>
    %145 = vector.broadcast %144 : vector<8x1xf32> to vector<8x8xf32>
    %146 = arith.subf %142, %145 : vector<8x8xf32>
    %147 = math.exp %146 : vector<8x8xf32>
    %cst_63 = arith.constant dense<0.000000e+00> : vector<8xf32>
    %148 = vector.multi_reduction <add>, %147, %cst_63 [1] : vector<8x8xf32> to vector<8xf32>
    %149 = vector.shape_cast %148 : vector<8xf32> to vector<8x1xf32>
    %150 = tpu.reciprocal %149 {approx = true} : vector<8x1xf32> -> vector<8x1xf32>
    %151 = vector.broadcast %150 : vector<8x1xf32> to vector<8x8xf32>
    %152 = arith.mulf %147, %151 : vector<8x8xf32>
    %cst_64 = arith.constant dense<0.000000e+00> : vector<8x8xf32>
    %153 = tpu.matmul %152, %138, %cst_64 {dimension_numbers = #tpu.dot_dimension_numbers<[1], [0], [0], [1], [0, 0, 1, 1], [], []>} : vector<8x8xf32>, vector<8x8xf32>, vector<8x8xf32> -> vector<8x8xf32>
    %c8_65 = arith.constant 8 : index
    %c0_66 = arith.constant 0 : index
    %154 = vector.load %arg9[%c8_65, %c0_66] : memref<32x32xf32, #tpu.memory_space<vmem>>, vector<8x32xf32>
    %cst_67 = arith.constant dense<0.000000e+00> : vector<8x32xf32>
    %155 = tpu.matmul %153, %154, %cst_67 {dimension_numbers = #tpu.dot_dimension_numbers<[1], [0], [0], [1], [0, 0, 1, 1], [], []>} : vector<8x8xf32>, vector<8x32xf32>, vector<8x32xf32> -> vector<8x32xf32>
    %156 = arith.addf %135, %155 : vector<8x32xf32>
    %157 = vector.extract_strided_slice %30 {offsets = [8, 16], sizes = [8, 8], strides = [1, 1]} : vector<16x32xf32> to vector<8x8xf32>
    %158 = vector.extract_strided_slice %31 {offsets = [8, 16], sizes = [8, 8], strides = [1, 1]} : vector<16x32xf32> to vector<8x8xf32>
    %159 = vector.extract_strided_slice %32 {offsets = [8, 16], sizes = [8, 8], strides = [1, 1]} : vector<16x32xf32> to vector<8x8xf32>
    %cst_68 = arith.constant dense<0.000000e+00> : vector<8x8xf32>
    %160 = tpu.matmul %157, %158, %cst_68 {dimension_numbers = #tpu.dot_dimension_numbers<[1], [1], [0], [0], [0, 0, 1, 0], [], []>} : vector<8x8xf32>, vector<8x8xf32>, vector<8x8xf32> -> vector<8x8xf32>
    %c2_69 = arith.constant 2 : index
    %c0_70 = arith.constant 0 : index
    %c0_71 = arith.constant 0 : index
    %161 = vector.load %arg2[%c2_69, %c0_70, %c0_71] : memref<4x8x8xf32, #tpu.memory_space<vmem>>, vector<1x8x8xf32>
    %162 = vector.shape_cast %161 : vector<1x8x8xf32> to vector<8x8xf32>
    %163 = arith.addf %160, %162 : vector<8x8xf32>
    %cst_72 = arith.constant dense<0xFF800000> : vector<8xf32>
    %164 = vector.multi_reduction <maximumf>, %163, %cst_72 [1] : vector<8x8xf32> to vector<8xf32>
    %165 = vector.shape_cast %164 : vector<8xf32> to vector<8x1xf32>
    %166 = vector.broadcast %165 : vector<8x1xf32> to vector<8x8xf32>
    %167 = arith.subf %163, %166 : vector<8x8xf32>
    %168 = math.exp %167 : vector<8x8xf32>
    %cst_73 = arith.constant dense<0.000000e+00> : vector<8xf32>
    %169 = vector.multi_reduction <add>, %168, %cst_73 [1] : vector<8x8xf32> to vector<8xf32>
    %170 = vector.shape_cast %169 : vector<8xf32> to vector<8x1xf32>
    %171 = tpu.reciprocal %170 {approx = true} : vector<8x1xf32> -> vector<8x1xf32>
    %172 = vector.broadcast %171 : vector<8x1xf32> to vector<8x8xf32>
    %173 = arith.mulf %168, %172 : vector<8x8xf32>
    %cst_74 = arith.constant dense<0.000000e+00> : vector<8x8xf32>
    %174 = tpu.matmul %173, %159, %cst_74 {dimension_numbers = #tpu.dot_dimension_numbers<[1], [0], [0], [1], [0, 0, 1, 1], [], []>} : vector<8x8xf32>, vector<8x8xf32>, vector<8x8xf32> -> vector<8x8xf32>
    %c16_75 = arith.constant 16 : index
    %c0_76 = arith.constant 0 : index
    %175 = vector.load %arg9[%c16_75, %c0_76] : memref<32x32xf32, #tpu.memory_space<vmem>>, vector<8x32xf32>
    %cst_77 = arith.constant dense<0.000000e+00> : vector<8x32xf32>
    %176 = tpu.matmul %174, %175, %cst_77 {dimension_numbers = #tpu.dot_dimension_numbers<[1], [0], [0], [1], [0, 0, 1, 1], [], []>} : vector<8x8xf32>, vector<8x32xf32>, vector<8x32xf32> -> vector<8x32xf32>
    %177 = arith.addf %156, %176 : vector<8x32xf32>
    %178 = vector.extract_strided_slice %30 {offsets = [8, 24], sizes = [8, 8], strides = [1, 1]} : vector<16x32xf32> to vector<8x8xf32>
    %179 = vector.extract_strided_slice %31 {offsets = [8, 24], sizes = [8, 8], strides = [1, 1]} : vector<16x32xf32> to vector<8x8xf32>
    %180 = vector.extract_strided_slice %32 {offsets = [8, 24], sizes = [8, 8], strides = [1, 1]} : vector<16x32xf32> to vector<8x8xf32>
    %cst_78 = arith.constant dense<0.000000e+00> : vector<8x8xf32>
    %181 = tpu.matmul %178, %179, %cst_78 {dimension_numbers = #tpu.dot_dimension_numbers<[1], [1], [0], [0], [0, 0, 1, 0], [], []>} : vector<8x8xf32>, vector<8x8xf32>, vector<8x8xf32> -> vector<8x8xf32>
    %c3_79 = arith.constant 3 : index
    %c0_80 = arith.constant 0 : index
    %c0_81 = arith.constant 0 : index
    %182 = vector.load %arg2[%c3_79, %c0_80, %c0_81] : memref<4x8x8xf32, #tpu.memory_space<vmem>>, vector<1x8x8xf32>
    %183 = vector.shape_cast %182 : vector<1x8x8xf32> to vector<8x8xf32>
    %184 = arith.addf %181, %183 : vector<8x8xf32>
    %cst_82 = arith.constant dense<0xFF800000> : vector<8xf32>
    %185 = vector.multi_reduction <maximumf>, %184, %cst_82 [1] : vector<8x8xf32> to vector<8xf32>
    %186 = vector.shape_cast %185 : vector<8xf32> to vector<8x1xf32>
    %187 = vector.broadcast %186 : vector<8x1xf32> to vector<8x8xf32>
    %188 = arith.subf %184, %187 : vector<8x8xf32>
    %189 = math.exp %188 : vector<8x8xf32>
    %cst_83 = arith.constant dense<0.000000e+00> : vector<8xf32>
    %190 = vector.multi_reduction <add>, %189, %cst_83 [1] : vector<8x8xf32> to vector<8xf32>
    %191 = vector.shape_cast %190 : vector<8xf32> to vector<8x1xf32>
    %192 = tpu.reciprocal %191 {approx = true} : vector<8x1xf32> -> vector<8x1xf32>
    %193 = vector.broadcast %192 : vector<8x1xf32> to vector<8x8xf32>
    %194 = arith.mulf %189, %193 : vector<8x8xf32>
    %cst_84 = arith.constant dense<0.000000e+00> : vector<8x8xf32>
    %195 = tpu.matmul %194, %180, %cst_84 {dimension_numbers = #tpu.dot_dimension_numbers<[1], [0], [0], [1], [0, 0, 1, 1], [], []>} : vector<8x8xf32>, vector<8x8xf32>, vector<8x8xf32> -> vector<8x8xf32>
    %c24_85 = arith.constant 24 : index
    %c0_86 = arith.constant 0 : index
    %196 = vector.load %arg9[%c24_85, %c0_86] : memref<32x32xf32, #tpu.memory_space<vmem>>, vector<8x32xf32>
    %cst_87 = arith.constant dense<0.000000e+00> : vector<8x32xf32>
    %197 = tpu.matmul %195, %196, %cst_87 {dimension_numbers = #tpu.dot_dimension_numbers<[1], [0], [0], [1], [0, 0, 1, 1], [], []>} : vector<8x8xf32>, vector<8x32xf32>, vector<8x32xf32> -> vector<8x32xf32>
    %198 = arith.addf %177, %197 : vector<8x32xf32>
    %199 = tpu.concatenate %115, %198 in 0 : vector<8x32xf32>, vector<8x32xf32> -> vector<16x32xf32>
    %c0_88 = arith.constant 0 : index
    %c0_89 = arith.constant 0 : index
    %200 = vector.load %arg10[%c0_88, %c0_89] : memref<1x32xf32, #tpu.memory_space<vmem>>, vector<1x32xf32>
    %201 = vector.broadcast %200 : vector<1x32xf32> to vector<16x32xf32>
    %202 = arith.addf %199, %201 : vector<16x32xf32>
    %203 = arith.addf %0, %202 : vector<16x32xf32>
    %c0_90 = arith.constant 0 : index
    %c0_91 = arith.constant 0 : index
    %204 = vector.load %arg5[%c0_90, %c0_91] : memref<1x32xf32, #tpu.memory_space<vmem>>, vector<1x32xf32>
    %c0_92 = arith.constant 0 : index
    %c0_93 = arith.constant 0 : index
    %205 = vector.load %arg6[%c0_92, %c0_93] : memref<1x32xf32, #tpu.memory_space<vmem>>, vector<1x32xf32>
    %cst_94 = arith.constant dense<0.000000e+00> : vector<16xf32>
    %206 = vector.multi_reduction <add>, %203, %cst_94 [1] : vector<16x32xf32> to vector<16xf32>
    %207 = vector.shape_cast %206 : vector<16xf32> to vector<16x1xf32>
    %cst_95 = arith.constant 3.200000e+01 : f32
    %208 = vector.broadcast %cst_95 : f32 to vector<16x1xf32>
    %209 = arith.divf %207, %208 : vector<16x1xf32>
    %210 = vector.broadcast %209 : vector<16x1xf32> to vector<16x32xf32>
    %211 = arith.subf %203, %210 : vector<16x32xf32>
    %212 = arith.mulf %211, %211 : vector<16x32xf32>
    %cst_96 = arith.constant dense<0.000000e+00> : vector<16xf32>
    %213 = vector.multi_reduction <add>, %212, %cst_96 [1] : vector<16x32xf32> to vector<16xf32>
    %214 = vector.shape_cast %213 : vector<16xf32> to vector<16x1xf32>
    %cst_97 = arith.constant 0.0322580636 : f32
    %215 = vector.broadcast %cst_97 : f32 to vector<16x1xf32>
    %216 = arith.mulf %214, %215 : vector<16x1xf32>
    %217 = vector.broadcast %209 : vector<16x1xf32> to vector<16x32xf32>
    %218 = arith.subf %203, %217 : vector<16x32xf32>
    %219 = vector.broadcast %204 : vector<1x32xf32> to vector<16x32xf32>
    %220 = arith.mulf %219, %218 : vector<16x32xf32>
    %221 = math.sqrt %216 : vector<16x1xf32>
    %cst_98 = arith.constant 1.000000e+06 : f32
    %222 = vector.broadcast %cst_98 : f32 to vector<16x1xf32>
    %223 = arith.addf %221, %222 : vector<16x1xf32>
    %224 = vector.broadcast %223 : vector<16x1xf32> to vector<16x32xf32>
    %225 = arith.divf %220, %224 : vector<16x32xf32>
    %226 = vector.broadcast %205 : vector<1x32xf32> to vector<16x32xf32>
    %227 = arith.addf %225, %226 : vector<16x32xf32>
    %c0_99 = arith.constant 0 : index
    %c0_100 = arith.constant 0 : index
    %228 = vector.load %arg11[%c0_99, %c0_100] : memref<32x64xf32, #tpu.memory_space<vmem>>, vector<32x64xf32>
    %cst_101 = arith.constant dense<0.000000e+00> : vector<16x64xf32>
    %229 = tpu.matmul %227, %228, %cst_101 {dimension_numbers = #tpu.dot_dimension_numbers<[1], [0], [0], [1], [0, 0, 1, 1], [], []>} : vector<16x32xf32>, vector<32x64xf32>, vector<16x64xf32> -> vector<16x64xf32>
    %c0_102 = arith.constant 0 : index
    %c0_103 = arith.constant 0 : index
    %230 = vector.load %arg12[%c0_102, %c0_103] : memref<1x64xf32, #tpu.memory_space<vmem>>, vector<1x64xf32>
    %231 = vector.broadcast %230 : vector<1x64xf32> to vector<16x64xf32>
    %232 = arith.addf %229, %231 : vector<16x64xf32>
    %cst_104 = arith.constant 0.000000e+00 : f32
    %233 = vector.broadcast %cst_104 : f32 to vector<16x64xf32>
    %234 = arith.maximumf %232, %233 : vector<16x64xf32>
    %c0_105 = arith.constant 0 : index
    %c0_106 = arith.constant 0 : index
    %235 = vector.load %arg13[%c0_105, %c0_106] : memref<64x32xf32, #tpu.memory_space<vmem>>, vector<64x32xf32>
    %cst_107 = arith.constant dense<0.000000e+00> : vector<16x32xf32>
    %236 = tpu.matmul %234, %235, %cst_107 {dimension_numbers = #tpu.dot_dimension_numbers<[1], [0], [0], [1], [0, 0, 1, 1], [], []>} : vector<16x64xf32>, vector<64x32xf32>, vector<16x32xf32> -> vector<16x32xf32>
    %c0_108 = arith.constant 0 : index
    %c0_109 = arith.constant 0 : index
    %237 = vector.load %arg14[%c0_108, %c0_109] : memref<1x32xf32, #tpu.memory_space<vmem>>, vector<1x32xf32>
    %238 = vector.broadcast %237 : vector<1x32xf32> to vector<16x32xf32>
    %239 = arith.addf %236, %238 : vector<16x32xf32>
    %240 = arith.addf %203, %239 : vector<16x32xf32>
    %c0_110 = arith.constant 0 : index
    %c0_111 = arith.constant 0 : index
    %241 = vector.load %arg15[%c0_110, %c0_111] : memref<16x32xf32, #tpu.memory_space<vmem>>, vector<16x32xf32>
    tpu.vector_store %arg15[%c0_110, %c0_111], %240 {strides = array<i32>} : memref<16x32xf32, #tpu.memory_space<vmem>>, vector<16x32xf32>,
    return
  }
  func.func @transform_0(%arg0: i32) -> (i32, i32) {
    %c0_i32 = arith.constant 0 : i32
    %c0_i32_0 = arith.constant 0 : i32
    %c0_i32_1 = arith.constant 0 : i32
    return %c0_i32, %c0_i32_0 : i32, i32
  }
  func.func @transform_1(%arg0: i32) -> (i32, i32, i32) {
    %c0_i32 = arith.constant 0 : i32
    %c0_i32_0 = arith.constant 0 : i32
    %c0_i32_1 = arith.constant 0 : i32
    %c0_i32_2 = arith.constant 0 : i32
    return %c0_i32, %c0_i32_0, %c0_i32_1 : i32, i32, i32
  }
  func.func @transform_2(%arg0: i32) -> (i32, i32) {
    %c0_i32 = arith.constant 0 : i32
    %c0_i32_0 = arith.constant 0 : i32
    %c0_i32_1 = arith.constant 0 : i32
    return %c0_i32, %c0_i32_0 : i32, i32
  }
  func.func @transform_3(%arg0: i32) -> (i32, i32) {
    %c0_i32 = arith.constant 0 : i32
    %c0_i32_0 = arith.constant 0 : i32
    %c0_i32_1 = arith.constant 0 : i32
    return %c0_i32, %c0_i32_0 : i32, i32
  }
  func.func @transform_4(%arg0: i32) -> (i32, i32) {
    %c0_i32 = arith.constant 0 : i32
    %c0_i32_0 = arith.constant 0 : i32
    %c0_i32_1 = arith.constant 0 : i32
    return %c0_i32, %c0_i32_0 : i32, i32
  }
  func.func @transform_5(%arg0: i32) -> (i32, i32) {
    %c0_i32 = arith.constant 0 : i32
    %c0_i32_0 = arith.constant 0 : i32
    %c0_i32_1 = arith.constant 0 : i32
    return %c0_i32, %c0_i32_0 : i32, i32
  }
  func.func @transform_6(%arg0: i32) -> (i32, i32) {
    %c0_i32 = arith.constant 0 : i32
    %c0_i32_0 = arith.constant 0 : i32
    %c0_i32_1 = arith.constant 0 : i32
    return %c0_i32, %c0_i32_0 : i32, i32
  }
  func.func @transform_7(%arg0: i32) -> (i32, i32) {
    %c0_i32 = arith.constant 0 : i32
    %c0_i32_0 = arith.constant 0 : i32
    %c0_i32_1 = arith.constant 0 : i32
    return %c0_i32, %c0_i32_0 : i32, i32
  }
  func.func @transform_8(%arg0: i32) -> (i32, i32) {
    %c0_i32 = arith.constant 0 : i32
    %c0_i32_0 = arith.constant 0 : i32
    %c0_i32_1 = arith.constant 0 : i32
    return %c0_i32, %c0_i32_0 : i32, i32
  }
  func.func @transform_9(%arg0: i32) -> (i32, i32) {
    %c0_i32 = arith.constant 0 : i32
    %c0_i32_0 = arith.constant 0 : i32
    %c0_i32_1 = arith.constant 0 : i32
    return %c0_i32, %c0_i32_0 : i32, i32
  }
  func.func @transform_10(%arg0: i32) -> (i32, i32) {
    %c0_i32 = arith.constant 0 : i32
    %c0_i32_0 = arith.constant 0 : i32
    %c0_i32_1 = arith.constant 0 : i32
    return %c0_i32, %c0_i32_0 : i32, i32
  }
  func.func @transform_11(%arg0: i32) -> (i32, i32) {
    %c0_i32 = arith.constant 0 : i32
    %c0_i32_0 = arith.constant 0 : i32
    %c0_i32_1 = arith.constant 0 : i32
    return %c0_i32, %c0_i32_0 : i32, i32
  }
  func.func @transform_12(%arg0: i32) -> (i32, i32) {
    %c0_i32 = arith.constant 0 : i32
    %c0_i32_0 = arith.constant 0 : i32
    %c0_i32_1 = arith.constant 0 : i32
    return %c0_i32, %c0_i32_0 : i32, i32
  }
  func.func @transform_13(%arg0: i32) -> (i32, i32) {
    %c0_i32 = arith.constant 0 : i32
    %c0_i32_0 = arith.constant 0 : i32
    %c0_i32_1 = arith.constant 0 : i32
    return %c0_i32, %c0_i32_0 : i32, i32
  }
  func.func @transform_14(%arg0: i32) -> (i32, i32) {
    %c0_i32 = arith.constant 0 : i32
    %c0_i32_0 = arith.constant 0 : i32
    %c0_i32_1 = arith.constant 0 : i32
    return %c0_i32, %c0_i32_0 : i32, i32
  }
}

</mosaic_0001>

<llo_original>
// kernel: tpu_custom_call.1
$region0: #{tpu_custom_call.1}
  #allocation0 [shape = 'u32[]', space=smem, size = 0x4, offset = 0x4, fixed_abs, tag = 'smem constant byte address 0x4 - core index']
  #allocation1 [shape = 'u32[144,128]{1,0:T(1,128)}', space=vmem, size = 0x12000, scoped, tag = 'internal scratch']
  %s0 = inlined_call_operand.hbm [shape: f32[16,32], index: 0, kind: input, shape index: {}]
  %s1 = inlined_call_operand.vmem [shape: f32[4,8,8], index: 1, kind: input, shape index: {}]
  %s2 = inlined_call_operand.vmem [shape: f32[1,32], index: 2, kind: input, shape index: {}]
  %s3 = inlined_call_operand.vmem [shape: f32[1,32], index: 3, kind: input, shape index: {}]
  %s4 = inlined_call_operand.vmem [shape: f32[1,32], index: 4, kind: input, shape index: {}]
  %s5 = inlined_call_operand.vmem [shape: f32[1,32], index: 5, kind: input, shape index: {}]
  %s6 = inlined_call_operand.vmem [shape: f32[32,96], index: 6, kind: input, shape index: {}]
  %s7 = inlined_call_operand.vmem [shape: f32[1,96], index: 7, kind: input, shape index: {}]
  %s8 = inlined_call_operand.vmem [shape: f32[32,32], index: 8, kind: input, shape index: {}]
  %s9 = inlined_call_operand.vmem [shape: f32[1,32], index: 9, kind: input, shape index: {}]
  %s10 = inlined_call_operand.hbm [shape: f32[32,64], index: 10, kind: input, shape index: {}]
  %s11 = inlined_call_operand.vmem [shape: f32[1,64], index: 11, kind: input, shape index: {}]
  %s12 = inlined_call_operand.vmem [shape: f32[64,32], index: 12, kind: input, shape index: {}]
  %s13 = inlined_call_operand.vmem [shape: f32[1,32], index: 13, kind: input, shape index: {}]
  %s14 = inlined_call_operand.hbm [shape: f32[16,32], index: 14, kind: output, shape index: {}]
  %s15 = sld [smem:[#allocation0]]
  $region74: #{tpu_custom_call.1} parent=0
    _
  %s17 = ssub.s32 1, %s15
  %s18 = scalar_select 0, %s17, %s15
  $region1: #{tpu_custom_call.1} parent=0
    #allocation2 [shape = 'u8[8192]{0}', space=vmem, size = 0x2000, scoped, tag = 'input window, operand 0, single buffered']
    #allocation3 [shape = 's32[1]{0}', space=sflag, size = 0x4, scoped, tag = 'scoped memory for tpu_custom_call.1']
    #allocation4 [shape = 's32[1]{0}', space=sflag, size = 0x4, scoped, tag = 'scoped memory for tpu_custom_call.1']
    #allocation5 [shape = 'u8[16384]{0}', space=vmem, size = 0x4000, scoped, tag = 'input window, operand 10, single buffered']
    #allocation6 [shape = 's32[1]{0}', space=sflag, size = 0x4, scoped, tag = 'scoped memory for tpu_custom_call.1']
    #allocation7 [shape = 'u8[8192]{0}', space=vmem, size = 0x2000, scoped, tag = 'output window, operand 0, single buffered']
    %19 = vsyncpa [#allocation3], 0
    %20 = vsyncpa [#allocation6], 0
    %21 = vsyncpa [#allocation4], 0
    // Predicated region
    $region2: #{tpu_custom_call.1} parent=1 // pred_check
      _
    $region3: #{tpu_custom_call.1} parent=1 // pred_check_branch
      %23 = sbr.rel (0) target = $region5
    $region4: #{tpu_custom_call.1} parent=1 // pred_region
      %s25 = ssub.s32 256, 256
      %26 = vsyncadd [#allocation3], %s25
      %s27 = sshll.u32 [#allocation2], 4
      %s28 = int_to_ptr.vmem [resolvable:$true] %s27
      %33 = dma.hbm_to_vmem [thread:$0]  %s0, 256, %s28, [#allocation3], 128, 128, 8
    $region5: #{tpu_custom_call.1} parent=1 // pred_fallthru
      _
    // Predicated region
    $region6: #{tpu_custom_call.1} parent=1 // pred_check
      _
    $region7: #{tpu_custom_call.1} parent=1 // pred_check_branch
      %35 = sbr.rel (0) target = $region9
    $region8: #{tpu_custom_call.1} parent=1 // pred_region
      _
    $region9: #{tpu_custom_call.1} parent=1 // pred_fallthru
      _
    // Predicated region
    $region10: #{tpu_custom_call.1} parent=1 // pred_check
      _
    $region11: #{tpu_custom_call.1} parent=1 // pred_check_branch
      %37 = sbr.rel (0) target = $region13
    $region12: #{tpu_custom_call.1} parent=1 // pred_region
      _
    $region13: #{tpu_custom_call.1} parent=1 // pred_fallthru
      _
    // Predicated region
    $region14: #{tpu_custom_call.1} parent=1 // pred_check
      _
    $region15: #{tpu_custom_call.1} parent=1 // pred_check_branch
      %39 = sbr.rel (0) target = $region17
    $region16: #{tpu_custom_call.1} parent=1 // pred_region
      _
    $region17: #{tpu_custom_call.1} parent=1 // pred_fallthru
      _
    // Predicated region
    $region18: #{tpu_custom_call.1} parent=1 // pred_check
      _
    $region19: #{tpu_custom_call.1} parent=1 // pred_check_branch
      %41 = sbr.rel (0) target = $region21
    $region20: #{tpu_custom_call.1} parent=1 // pred_region
      _
    $region21: #{tpu_custom_call.1} parent=1 // pred_fallthru
      _
    // Predicated region
    $region22: #{tpu_custom_call.1} parent=1 // pred_check
      _
    $region23: #{tpu_custom_call.1} parent=1 // pred_check_branch
      %43 = sbr.rel (0) target = $region25
    $region24: #{tpu_custom_call.1} parent=1 // pred_region
      _
    $region25: #{tpu_custom_call.1} parent=1 // pred_fallthru
      _
    // Predicated region
    $region26: #{tpu_custom_call.1} parent=1 // pred_check
      _
    $region27: #{tpu_custom_call.1} parent=1 // pred_check_branch
      %45 = sbr.rel (0) target = $region29
    $region28: #{tpu_custom_call.1} parent=1 // pred_region
      _
    $region29: #{tpu_custom_call.1} parent=1 // pred_fallthru
      _
    // Predicated region
    $region30: #{tpu_custom_call.1} parent=1 // pred_check
      _
    $region31: #{tpu_custom_call.1} parent=1 // pred_check_branch
      %47 = sbr.rel (0) target = $region33
    $region32: #{tpu_custom_call.1} parent=1 // pred_region
      _
    $region33: #{tpu_custom_call.1} parent=1 // pred_fallthru
      _
    // Predicated region
    $region34: #{tpu_custom_call.1} parent=1 // pred_check
      _
    $region35: #{tpu_custom_call.1} parent=1 // pred_check_branch
      %49 = sbr.rel (0) target = $region37
    $region36: #{tpu_custom_call.1} parent=1 // pred_region
      _
    $region37: #{tpu_custom_call.1} parent=1 // pred_fallthru
      _
    // Predicated region
    $region38: #{tpu_custom_call.1} parent=1 // pred_check
      _
    $region39: #{tpu_custom_call.1} parent=1 // pred_check_branch
      %51 = sbr.rel (0) target = $region41
    $region40: #{tpu_custom_call.1} parent=1 // pred_region
      _
    $region41: #{tpu_custom_call.1} parent=1 // pred_fallthru
      _
    // Predicated region
    $region42: #{tpu_custom_call.1} parent=1 // pred_check
      _
    $region43: #{tpu_custom_call.1} parent=1 // pred_check_branch
      %53 = sbr.rel (0) target = $region45
    $region44: #{tpu_custom_call.1} parent=1 // pred_region
      %s55 = ssub.s32 512, 512
      %56 = vsyncadd [#allocation6], %s55
      %s57 = sshll.u32 [#allocation5], 4
      %s58 = int_to_ptr.vmem [resolvable:$true] %s57
      %63 = dma.hbm_to_vmem [thread:$0]  %s10, 512, %s58, [#allocation6], 128, 128, 8
    $region45: #{tpu_custom_call.1} parent=1 // pred_fallthru
      _
    // Predicated region
    $region46: #{tpu_custom_call.1} parent=1 // pred_check
      _
    $region47: #{tpu_custom_call.1} parent=1 // pred_check_branch
      %65 = sbr.rel (0) target = $region49
    $region48: #{tpu_custom_call.1} parent=1 // pred_region
      _
    $region49: #{tpu_custom_call.1} parent=1 // pred_fallthru
      _
    // Predicated region
    $region50: #{tpu_custom_call.1} parent=1 // pred_check
      _
    $region51: #{tpu_custom_call.1} parent=1 // pred_check_branch
      %67 = sbr.rel (0) target = $region53
    $region52: #{tpu_custom_call.1} parent=1 // pred_region
      _
    $region53: #{tpu_custom_call.1} parent=1 // pred_fallthru
      _
    // Predicated region
    $region54: #{tpu_custom_call.1} parent=1 // pred_check
      _
    $region55: #{tpu_custom_call.1} parent=1 // pred_check_branch
      %69 = sbr.rel (0) target = $region57
    $region56: #{tpu_custom_call.1} parent=1 // pred_region
      _
    $region57: #{tpu_custom_call.1} parent=1 // pred_fallthru
      _
    // Predicated region
    $region58: #{tpu_custom_call.1} parent=1 // pred_check
      _
    $region59: #{tpu_custom_call.1} parent=1 // pred_check_branch
      %71 = sbr.rel (0) target = $region61
    $region60: #{tpu_custom_call.1} parent=1 // pred_region
      %72 = dma.done [#allocation3], 256
    $region61: #{tpu_custom_call.1} parent=1 // pred_fallthru
      _
    // Predicated region
    $region62: #{tpu_custom_call.1} parent=1 // pred_check
      _
    $region63: #{tpu_custom_call.1} parent=1 // pred_check_branch
      %74 = sbr.rel (0) target = $region65
    $region64: #{tpu_custom_call.1} parent=1 // pred_region
      %75 = dma.done [#allocation6], 512
    $region65: #{tpu_custom_call.1} parent=1 // pred_fallthru
      _
    %v76 = vld [vmem:[#allocation2] sm:$0xff]
    %v77 = vld [vmem:[#allocation2 + $0x8] sm:$0xff]
    %v78 = vld [vmem:[%s2] sm:$0x1]
    %v79 = vld [vmem:[%s3] sm:$0x1]
    %vm80 = vcmask 261120
    %v81 = vsel %vm80, %v76, 0.0
    %82 = vadd.xlane.f32.xlu0 %v81
    %v83 = vpop.xlane.xlu0 %82
    %v84 = vsel %vm80, %v77, 0.0
    %85 = vadd.xlane.f32.xlu0 %v84
    %v86 = vpop.xlane.xlu0 %85
    %v87 = vrcp.pop 32.0
    %v88 = vmul.f32 %v83, %v87
    %v89 = vmul.f32 %v86, %v87
    %v90 = vsub.f32 %v76, %v88
    %v91 = vsub.f32 %v77, %v89
    %v92 = vmul.f32 %v90, %v90
    %v93 = vmul.f32 %v91, %v91
    %v94 = vsel %vm80, %v92, 0.0
    %95 = vadd.xlane.f32.xlu0 %v94
    %v96 = vpop.xlane.xlu0 %95
    %v97 = vsel %vm80, %v93, 0.0
    %98 = vadd.xlane.f32.xlu0 %v97
    %v99 = vpop.xlane.xlu0 %98
    %v100 = vmul.f32 %v96, 0.032258064
    %v101 = vmul.f32 %v99, 0.032258064
    %v103 = vlaneseq
    %v104 = vshrl.u32 %v103, 7
    %v105 = vsub.s32 0, %v104
    %v106 = vrot.slane %v78, %v105
    %v108 = vmul.f32 %v106, %v90
    %v109 = vmul.f32 %v106, %v91
    %v110 = vrsqrt.pop %v100
    %v111 = vmul.f32 %v100, %v110
    %vm112 = vcmp.eq.f32.partialorder %v100, inf
    %v113 = vsel %vm112, %v100, %v111
    %vm114 = vcmp.eq.f32.partialorder %v100, 0.0
    %v115 = vand.u32 %v100, 2147483648
    %v116 = vsel %vm114, %v115, %v113
    %v117 = vrsqrt.pop %v101
    %v118 = vmul.f32 %v101, %v117
    %vm119 = vcmp.eq.f32.partialorder %v101, inf
    %v120 = vsel %vm119, %v101, %v118
    %vm121 = vcmp.eq.f32.partialorder %v101, 0.0
    %v122 = vand.u32 %v101, 2147483648
    %v123 = vsel %vm121, %v122, %v120
    %v124 = vadd.f32 %v116, 1000000.0
    %v125 = vadd.f32 %v123, 1000000.0
    %v126 = vrcp.pop %v124
    %v127 = vmul.f32 %v108, %v126
    %v128 = vrcp.pop %v125
    %v129 = vmul.f32 %v109, %v128
    %v131 = vlaneseq
    %v132 = vshrl.u32 %v131, 7
    %v133 = vsub.s32 0, %v132
    %v134 = vrot.slane %v79, %v133
    %v136 = vadd.f32 %v127, %v134
    %v137 = vadd.f32 %v129, %v134
    %v138 = vld [vmem:[%s6] sm:$0xff]
    %v139 = vld [vmem:[%s6 + $0x8] sm:$0xff]
    %v140 = vld [vmem:[%s6 + $0x10] sm:$0xff]
    %v141 = vld [vmem:[%s6 + $0x18] sm:$0xff]
    %v142 = vld [vmem:[%s7] sm:$0x1]
    %v144 = vlaneseq
    %v145 = vshrl.u32 %v144, 7
    %v146 = vsub.s32 0, %v145
    %v147 = vrot.slane %v142, %v146
    %v150 = vsel %vm80, %v136, 0
    %v153 = vsel %vm80, %v137, 0
    %155 = vmatprep.subr.mxu0 0.0
    %156 = vmatpush1.msra.mxu0 %v138
    %157 = vmatprep.subr.mxu0 0.0
    %158 = vmatpush1.msra.mxu0 %v139
    %159 = vmatprep.subr.mxu0 0.0
    %160 = vmatpush1.msra.mxu0 %v140
    %161 = vmatprep.subr.mxu0 0.0
    %162 = vmatpush1.msra.mxu0 %v141
    %163 = vmatprep.subr.mxu0 0.0
    %164 = vmatpush1.msra.mxu0 0.0
    %165 = vmatprep.subr.mxu0 0.0
    %166 = vmatpush1.msra.mxu0 0.0
    %167 = vmatprep.subr.mxu0 0.0
    %168 = vmatpush1.msra.mxu0 0.0
    %169 = vmatprep.subr.mxu0 0.0
    %170 = vmatpush1.msra.mxu0 0.0
    %171 = vmatprep.subr.mxu0 0.0
    %172 = vmatpush1.msra.mxu0 0.0
    %173 = vmatprep.subr.mxu0 0.0
    %174 = vmatpush1.msra.mxu0 0.0
    %175 = vmatprep.subr.mxu0 0.0
    %176 = vmatpush1.msra.mxu0 0.0
    %177 = vmatprep.subr.mxu0 0.0
    %178 = vmatpush1.msra.mxu0 0.0
    %179 = vmatprep.subr.mxu0 0.0
    %180 = vmatpush1.msra.mxu0 0.0
    %181 = vmatprep.subr.mxu0 0.0
    %182 = vmatpush1.msra.mxu0 0.0
    %183 = vmatprep.subr.mxu0 0.0
    %184 = vmatpush1.msra.mxu0 0.0
    %185 = vmatprep.subr.mxu0 0.0
    %186 = vmatpush1.msra.mxu0 0.0
    %187 = vmatprep.subr.mxu0 0.0
    %188 = vmatpush1.msra.mxu0 0.0
    %189 = vmatprep.subr.mxu0 0.0
    %190 = vmatpush1.msra.mxu0 0.0
    %191 = vmatprep.subr.mxu0 0.0
    %192 = vmatpush1.msra.mxu0 0.0
    %193 = vmatprep.subr.mxu0 0.0
    %194 = vmatpush1.msra.mxu0 0.0
    %195 = vmatprep.subr.mxu0 0.0
    %196 = vmatpush1.msra.mxu0 0.0
    %197 = vmatprep.subr.mxu0 0.0
    %198 = vmatpush1.msra.mxu0 0.0
    %199 = vmatprep.subr.mxu0 0.0
    %200 = vmatpush1.msra.mxu0 0.0
    %201 = vmatprep.subr.mxu0 0.0
    %202 = vmatpush1.msra.mxu0 0.0
    %203 = vmatprep.subr.mxu0 0.0
    %204 = vmatpush1.msra.mxu0 0.0
    %205 = vmatprep.subr.mxu0 0.0
    %206 = vmatpush1.msra.mxu0 0.0
    %207 = vmatprep.subr.mxu0 0.0
    %208 = vmatpush1.msra.mxu0 0.0
    %209 = vmatprep.subr.mxu0 0.0
    %210 = vmatpush1.msra.mxu0 0.0
    %211 = vmatprep.subr.mxu0 0.0
    %212 = vmatpush1.msra.mxu0 0.0
    %213 = vmatprep.subr.mxu0 0.0
    %214 = vmatpush1.msra.mxu0 0.0
    %215 = vmatprep.subr.mxu0 0.0
    %216 = vmatpush1.msra.mxu0 0.0
    %217 = vmatprep.subr.mxu0 0.0
    %218 = vmatpush1.msra.mxu0 0.0
    %219 = vmatprep.mubr.f32.mxu0 0.0
    %220 = vmatmul.mubr.f32.gmra.mrb[0].mxu0 %v150
    %v221 = vpop.f32.mrb[0].mxu0
    %v222 = vadd.f32 %v147, %v221
    %v223 = vpop.f32.mrb[0].mxu0
    %224 = vmatprep.mubr.f32.mxu0 0.0
    %225 = vmatmul.mubr.f32.gmra.mrb[0].mxu0 %v153
    %v226 = vpop.f32.mrb[0].mxu0
    %v227 = vadd.f32 %v147, %v226
    %v228 = vpop.f32.mrb[0].mxu0
    %229 = vdwg.mxu0
    %v230 = vld [vmem:[%s1] sm:$0xff]
    %232 = vrot.lane.b32.xlu0 %v222, 96
    %v233 = vpop.permute.xlu0 %232
    %vm234 = vcmask 64512
    %v235 = vsel %vm234, %v222, 0
    %v237 = vsel %vm234, %v233, 0
    %239 = vmatprep.subr.mxu0 0.0
    %240 = vmatpush1.xpose.msra.mxu0 %v237
    %241 = vmatprep.subr.mxu0 0.0
    %242 = vmatpush1.xpose.msra.mxu0 0.0
    %243 = vmatprep.subr.mxu0 0.0
    %244 = vmatpush1.xpose.msra.mxu0 0.0
    %245 = vmatprep.subr.mxu0 0.0
    %246 = vmatpush1.xpose.msra.mxu0 0.0
    %247 = vmatprep.subr.mxu0 0.0
    %248 = vmatpush1.xpose.msra.mxu0 0.0
    %249 = vmatprep.subr.mxu0 0.0
    %250 = vmatpush1.xpose.msra.mxu0 0.0
    %251 = vmatprep.subr.mxu0 0.0
    %252 = vmatpush1.xpose.msra.mxu0 0.0
    %253 = vmatprep.subr.mxu0 0.0
    %254 = vmatpush1.xpose.msra.mxu0 0.0
    %255 = vmatprep.subr.mxu0 0.0
    %256 = vmatpush1.xpose.msra.mxu0 0.0
    %257 = vmatprep.subr.mxu0 0.0
    %258 = vmatpush1.xpose.msra.mxu0 0.0
    %259 = vmatprep.subr.mxu0 0.0
    %260 = vmatpush1.xpose.msra.mxu0 0.0
    %261 = vmatprep.subr.mxu0 0.0
    %262 = vmatpush1.xpose.msra.mxu0 0.0
    %263 = vmatprep.subr.mxu0 0.0
    %264 = vmatpush1.xpose.msra.mxu0 0.0
    %265 = vmatprep.subr.mxu0 0.0
    %266 = vmatpush1.xpose.msra.mxu0 0.0
    %267 = vmatprep.subr.mxu0 0.0
    %268 = vmatpush1.xpose.msra.mxu0 0.0
    %269 = vmatprep.subr.mxu0 0.0
    %270 = vmatpush1.xpose.msra.mxu0 0.0
    %271 = vmatprep.subr.mxu0 0.0
    %272 = vmatpush1.xpose.msra.mxu0 0.0
    %273 = vmatprep.subr.mxu0 0.0
    %274 = vmatpush1.xpose.msra.mxu0 0.0
    %275 = vmatprep.subr.mxu0 0.0
    %276 = vmatpush1.xpose.msra.mxu0 0.0
    %277 = vmatprep.subr.mxu0 0.0
    %278 = vmatpush1.xpose.msra.mxu0 0.0
    %279 = vmatprep.subr.mxu0 0.0
    %280 = vmatpush1.xpose.msra.mxu0 0.0
    %281 = vmatprep.subr.mxu0 0.0
    %282 = vmatpush1.xpose.msra.mxu0 0.0
    %283 = vmatprep.subr.mxu0 0.0
    %284 = vmatpush1.xpose.msra.mxu0 0.0
    %285 = vmatprep.subr.mxu0 0.0
    %286 = vmatpush1.xpose.msra.mxu0 0.0
    %287 = vmatprep.subr.mxu0 0.0
    %288 = vmatpush1.xpose.msra.mxu0 0.0
    %289 = vmatprep.subr.mxu0 0.0
    %290 = vmatpush1.xpose.msra.mxu0 0.0
    %291 = vmatprep.subr.mxu0 0.0
    %292 = vmatpush1.xpose.msra.mxu0 0.0
    %293 = vmatprep.subr.mxu0 0.0
    %294 = vmatpush1.xpose.msra.mxu0 0.0
    %295 = vmatprep.subr.mxu0 0.0
    %296 = vmatpush1.xpose.msra.mxu0 0.0
    %297 = vmatprep.subr.mxu0 0.0
    %298 = vmatpush1.xpose.msra.mxu0 0.0
    %299 = vmatprep.subr.mxu0 0.0
    %300 = vmatpush1.xpose.msra.mxu0 0.0
    %301 = vmatprep.subr.mxu0 0.0
    %302 = vmatpush1.xpose.msra.mxu0 0.0
    %303 = vmatprep.mubr.f32.mxu0 0.0
    %304 = vmatmul.mubr.f32.gmra.mrb[0].mxu0 %v235
    %v305 = vpop.f32.mrb[0].mxu0
    %v306 = vadd.f32 %v230, %v305
    %v307 = vpop.f32.mrb[0].mxu0
    %308 = vdwg.mxu0
    %v309 = vsel %vm234, %v306, -inf
    %310 = vmax.xlane.f32.xlu0 %v309
    %v311 = vpop.xlane.xlu0 %310
    %v312 = vsub.f32 %v306, %v311
    %v313 = vmul.f32 %v312, 1.442695
    %v314 = vpow.pop %v313
    %v315 = vsel %vm234, %v314, 0.0
    %316 = vadd.xlane.f32.xlu0 %v315
    %v317 = vpop.xlane.xlu0 %316
    %v318 = vrcp.pop %v317
    %v319 = vmul.f32 %v314, %v318
    %320 = vrot.lane.b32.xlu0 %v222, 64
    %v321 = vpop.permute.xlu0 %320
    %v324 = vsel %vm234, %v319, 0
    %326 = vmatprep.subr.mxu0 0.0
    %327 = vmatpush1.msra.mxu0 %v321
    %328 = vmatprep.subr.mxu0 0.0
    %329 = vmatpush1.msra.mxu0 0.0
    %330 = vmatprep.subr.mxu0 0.0
    %331 = vmatpush1.msra.mxu0 0.0
    %332 = vmatprep.subr.mxu0 0.0
    %333 = vmatpush1.msra.mxu0 0.0
    %334 = vmatprep.subr.mxu0 0.0
    %335 = vmatpush1.msra.mxu0 0.0
    %336 = vmatprep.subr.mxu0 0.0
    %337 = vmatpush1.msra.mxu0 0.0
    %338 = vmatprep.subr.mxu0 0.0
    %339 = vmatpush1.msra.mxu0 0.0
    %340 = vmatprep.subr.mxu0 0.0
    %341 = vmatpush1.msra.mxu0 0.0
    %342 = vmatprep.subr.mxu0 0.0
    %343 = vmatpush1.msra.mxu0 0.0
    %344 = vmatprep.subr.mxu0 0.0
    %345 = vmatpush1.msra.mxu0 0.0
    %346 = vmatprep.subr.mxu0 0.0
    %347 = vmatpush1.msra.mxu0 0.0
    %348 = vmatprep.subr.mxu0 0.0
    %349 = vmatpush1.msra.mxu0 0.0
    %350 = vmatprep.subr.mxu0 0.0
    %351 = vmatpush1.msra.mxu0 0.0
    %352 = vmatprep.subr.mxu0 0.0
    %353 = vmatpush1.msra.mxu0 0.0
    %354 = vmatprep.subr.mxu0 0.0
    %355 = vmatpush1.msra.mxu0 0.0
    %356 = vmatprep.subr.mxu0 0.0
    %357 = vmatpush1.msra.mxu0 0.0
    %358 = vmatprep.subr.mxu0 0.0
    %359 = vmatpush1.msra.mxu0 0.0
    %360 = vmatprep.subr.mxu0 0.0
    %361 = vmatpush1.msra.mxu0 0.0
    %362 = vmatprep.subr.mxu0 0.0
    %363 = vmatpush1.msra.mxu0 0.0
    %364 = vmatprep.subr.mxu0 0.0
    %365 = vmatpush1.msra.mxu0 0.0
    %366 = vmatprep.subr.mxu0 0.0
    %367 = vmatpush1.msra.mxu0 0.0
    %368 = vmatprep.subr.mxu0 0.0
    %369 = vmatpush1.msra.mxu0 0.0
    %370 = vmatprep.subr.mxu0 0.0
    %371 = vmatpush1.msra.mxu0 0.0
    %372 = vmatprep.subr.mxu0 0.0
    %373 = vmatpush1.msra.mxu0 0.0
    %374 = vmatprep.subr.mxu0 0.0
    %375 = vmatpush1.msra.mxu0 0.0
    %376 = vmatprep.subr.mxu0 0.0
    %377 = vmatpush1.msra.mxu0 0.0
    %378 = vmatprep.subr.mxu0 0.0
    %379 = vmatpush1.msra.mxu0 0.0
    %380 = vmatprep.subr.mxu0 0.0
    %381 = vmatpush1.msra.mxu0 0.0
    %382 = vmatprep.subr.mxu0 0.0
    %383 = vmatpush1.msra.mxu0 0.0
    %384 = vmatprep.subr.mxu0 0.0
    %385 = vmatpush1.msra.mxu0 0.0
    %386 = vmatprep.subr.mxu0 0.0
    %387 = vmatpush1.msra.mxu0 0.0
    %388 = vmatprep.subr.mxu0 0.0
    %389 = vmatpush1.msra.mxu0 0.0
    %390 = vmatprep.mubr.f32.mxu0 0.0
    %391 = vmatmul.mubr.f32.gmra.mrb[0].mxu0 %v324
    %v392 = vpop.f32.mrb[0].mxu0
    %v393 = vadd.f32 0.0, %v392
    %v394 = vpop.f32.mrb[0].mxu0
    %395 = vdwg.mxu0
    %v396 = vld [vmem:[%s8] sm:$0xff]
    %s397 = scalar_lea.vmem %s1, 8
    %v398 = vld [vmem:[%s397] sm:$0xff]
    %399 = vrot.lane.b32.xlu0 %v222, 120
    %v400 = vpop.permute.xlu0 %399
    %401 = vrot.lane.b32.xlu0 %v222, 88
    %v402 = vpop.permute.xlu0 %401
    %v403 = vsel %vm234, %v400, 0
    %v405 = vsel %vm234, %v402, 0
    %407 = vmatprep.subr.mxu0 0.0
    %408 = vmatpush1.xpose.msra.mxu0 %v405
    %409 = vmatprep.subr.mxu0 0.0
    %410 = vmatpush1.xpose.msra.mxu0 0.0
    %411 = vmatprep.subr.mxu0 0.0
    %412 = vmatpush1.xpose.msra.mxu0 0.0
    %413 = vmatprep.subr.mxu0 0.0
    %414 = vmatpush1.xpose.msra.mxu0 0.0
    %415 = vmatprep.subr.mxu0 0.0
    %416 = vmatpush1.xpose.msra.mxu0 0.0
    %417 = vmatprep.subr.mxu0 0.0
    %418 = vmatpush1.xpose.msra.mxu0 0.0
    %419 = vmatprep.subr.mxu0 0.0
    %420 = vmatpush1.xpose.msra.mxu0 0.0
    %421 = vmatprep.subr.mxu0 0.0
    %422 = vmatpush1.xpose.msra.mxu0 0.0
    %423 = vmatprep.subr.mxu0 0.0
    %424 = vmatpush1.xpose.msra.mxu0 0.0
    %425 = vmatprep.subr.mxu0 0.0
    %426 = vmatpush1.xpose.msra.mxu0 0.0
    %427 = vmatprep.subr.mxu0 0.0
    %428 = vmatpush1.xpose.msra.mxu0 0.0
    %429 = vmatprep.subr.mxu0 0.0
    %430 = vmatpush1.xpose.msra.mxu0 0.0
    %431 = vmatprep.subr.mxu0 0.0
    %432 = vmatpush1.xpose.msra.mxu0 0.0
    %433 = vmatprep.subr.mxu0 0.0
    %434 = vmatpush1.xpose.msra.mxu0 0.0
    %435 = vmatprep.subr.mxu0 0.0
    %436 = vmatpush1.xpose.msra.mxu0 0.0
    %437 = vmatprep.subr.mxu0 0.0
    %438 = vmatpush1.xpose.msra.mxu0 0.0
    %439 = vmatprep.subr.mxu0 0.0
    %440 = vmatpush1.xpose.msra.mxu0 0.0
    %441 = vmatprep.subr.mxu0 0.0
    %442 = vmatpush1.xpose.msra.mxu0 0.0
    %443 = vmatprep.subr.mxu0 0.0
    %444 = vmatpush1.xpose.msra.mxu0 0.0
    %445 = vmatprep.subr.mxu0 0.0
    %446 = vmatpush1.xpose.msra.mxu0 0.0
    %447 = vmatprep.subr.mxu0 0.0
    %448 = vmatpush1.xpose.msra.mxu0 0.0
    %449 = vmatprep.subr.mxu0 0.0
    %450 = vmatpush1.xpose.msra.mxu0 0.0
    %451 = vmatprep.subr.mxu0 0.0
    %452 = vmatpush1.xpose.msra.mxu0 0.0
    %453 = vmatprep.subr.mxu0 0.0
    %454 = vmatpush1.xpose.msra.mxu0 0.0
    %455 = vmatprep.subr.mxu0 0.0
    %456 = vmatpush1.xpose.msra.mxu0 0.0
    %457 = vmatprep.subr.mxu0 0.0
    %458 = vmatpush1.xpose.msra.mxu0 0.0
    %459 = vmatprep.subr.mxu0 0.0
    %460 = vmatpush1.xpose.msra.mxu0 0.0
    %461 = vmatprep.subr.mxu0 0.0
    %462 = vmatpush1.xpose.msra.mxu0 0.0
    %463 = vmatprep.subr.mxu0 0.0
    %464 = vmatpush1.xpose.msra.mxu0 0.0
    %465 = vmatprep.subr.mxu0 0.0
    %466 = vmatpush1.xpose.msra.mxu0 0.0
    %467 = vmatprep.subr.mxu0 0.0
    %468 = vmatpush1.xpose.msra.mxu0 0.0
    %469 = vmatprep.subr.mxu0 0.0
    %470 = vmatpush1.xpose.msra.mxu0 0.0
    %471 = vmatprep.mubr.f32.mxu0 0.0
    %472 = vmatmul.mubr.f32.gmra.mrb[0].mxu0 %v403
    %v473 = vpop.f32.mrb[0].mxu0
    %v474 = vadd.f32 %v398, %v473
    %v475 = vpop.f32.mrb[0].mxu0
    %476 = vdwg.mxu0
    %v477 = vsel %vm234, %v474, -inf
    %478 = vmax.xlane.f32.xlu0 %v477
    %v479 = vpop.xlane.xlu0 %478
    %v480 = vsub.f32 %v474, %v479
    %v481 = vmul.f32 %v480, 1.442695
    %v482 = vpow.pop %v481
    %v483 = vsel %vm234, %v482, 0.0
    %484 = vadd.xlane.f32.xlu0 %v483
    %v485 = vpop.xlane.xlu0 %484
    %v486 = vrcp.pop %v485
    %v487 = vmul.f32 %v482, %v486
    %488 = vrot.lane.b32.xlu0 %v222, 56
    %v489 = vpop.permute.xlu0 %488
    %v492 = vsel %vm234, %v487, 0
    %494 = vmatprep.subr.mxu0 0.0
    %495 = vmatpush1.msra.mxu0 %v489
    %496 = vmatprep.subr.mxu0 0.0
    %497 = vmatpush1.msra.mxu0 0.0
    %498 = vmatprep.subr.mxu0 0.0
    %499 = vmatpush1.msra.mxu0 0.0
    %500 = vmatprep.subr.mxu0 0.0
    %501 = vmatpush1.msra.mxu0 0.0
    %502 = vmatprep.subr.mxu0 0.0
    %503 = vmatpush1.msra.mxu0 0.0
    %504 = vmatprep.subr.mxu0 0.0
    %505 = vmatpush1.msra.mxu0 0.0
    %506 = vmatprep.subr.mxu0 0.0
    %507 = vmatpush1.msra.mxu0 0.0
    %508 = vmatprep.subr.mxu0 0.0
    %509 = vmatpush1.msra.mxu0 0.0
    %510 = vmatprep.subr.mxu0 0.0
    %511 = vmatpush1.msra.mxu0 0.0
    %512 = vmatprep.subr.mxu0 0.0
    %513 = vmatpush1.msra.mxu0 0.0
    %514 = vmatprep.subr.mxu0 0.0
    %515 = vmatpush1.msra.mxu0 0.0
    %516 = vmatprep.subr.mxu0 0.0
    %517 = vmatpush1.msra.mxu0 0.0
    %518 = vmatprep.subr.mxu0 0.0
    %519 = vmatpush1.msra.mxu0 0.0
    %520 = vmatprep.subr.mxu0 0.0
    %521 = vmatpush1.msra.mxu0 0.0
    %522 = vmatprep.subr.mxu0 0.0
    %523 = vmatpush1.msra.mxu0 0.0
    %524 = vmatprep.subr.mxu0 0.0
    %525 = vmatpush1.msra.mxu0 0.0
    %526 = vmatprep.subr.mxu0 0.0
    %527 = vmatpush1.msra.mxu0 0.0
    %528 = vmatprep.subr.mxu0 0.0
    %529 = vmatpush1.msra.mxu0 0.0
    %530 = vmatprep.subr.mxu0 0.0
    %531 = vmatpush1.msra.mxu0 0.0
    %532 = vmatprep.subr.mxu0 0.0
    %533 = vmatpush1.msra.mxu0 0.0
    %534 = vmatprep.subr.mxu0 0.0
    %535 = vmatpush1.msra.mxu0 0.0
    %536 = vmatprep.subr.mxu0 0.0
    %537 = vmatpush1.msra.mxu0 0.0
    %538 = vmatprep.subr.mxu0 0.0
    %539 = vmatpush1.msra.mxu0 0.0
    %540 = vmatprep.subr.mxu0 0.0
    %541 = vmatpush1.msra.mxu0 0.0
    %542 = vmatprep.subr.mxu0 0.0
    %543 = vmatpush1.msra.mxu0 0.0
    %544 = vmatprep.subr.mxu0 0.0
    %545 = vmatpush1.msra.mxu0 0.0
    %546 = vmatprep.subr.mxu0 0.0
    %547 = vmatpush1.msra.mxu0 0.0
    %548 = vmatprep.subr.mxu0 0.0
    %549 = vmatpush1.msra.mxu0 0.0
    %550 = vmatprep.subr.mxu0 0.0
    %551 = vmatpush1.msra.mxu0 0.0
    %552 = vmatprep.subr.mxu0 0.0
    %553 = vmatpush1.msra.mxu0 0.0
    %554 = vmatprep.subr.mxu0 0.0
    %555 = vmatpush1.msra.mxu0 0.0
    %556 = vmatprep.subr.mxu0 0.0
    %557 = vmatpush1.msra.mxu0 0.0
    %558 = vmatprep.mubr.f32.mxu0 0.0
    %559 = vmatmul.mubr.f32.gmra.mrb[0].mxu0 %v492
    %v560 = vpop.f32.mrb[0].mxu0
    %v561 = vadd.f32 0.0, %v560
    %v562 = vpop.f32.mrb[0].mxu0
    %563 = vdwg.mxu0
    %v564 = vld [vmem:[%s8 + $0x8] sm:$0xff]
    %v566 = vsel %vm234, %v561, 0
    %568 = vmatprep.subr.mxu0 0.0
    %569 = vmatpush1.msra.mxu0 %v564
    %570 = vmatprep.subr.mxu0 0.0
    %571 = vmatpush1.msra.mxu0 0.0
    %572 = vmatprep.subr.mxu0 0.0
    %573 = vmatpush1.msra.mxu0 0.0
    %574 = vmatprep.subr.mxu0 0.0
    %575 = vmatpush1.msra.mxu0 0.0
    %576 = vmatprep.subr.mxu0 0.0
    %577 = vmatpush1.msra.mxu0 0.0
    %578 = vmatprep.subr.mxu0 0.0
    %579 = vmatpush1.msra.mxu0 0.0
    %580 = vmatprep.subr.mxu0 0.0
    %581 = vmatpush1.msra.mxu0 0.0
    %582 = vmatprep.subr.mxu0 0.0
    %583 = vmatpush1.msra.mxu0 0.0
    %584 = vmatprep.subr.mxu0 0.0
    %585 = vmatpush1.msra.mxu0 0.0
    %586 = vmatprep.subr.mxu0 0.0
    %587 = vmatpush1.msra.mxu0 0.0
    %588 = vmatprep.subr.mxu0 0.0
    %589 = vmatpush1.msra.mxu0 0.0
    %590 = vmatprep.subr.mxu0 0.0
    %591 = vmatpush1.msra.mxu0 0.0
    %592 = vmatprep.subr.mxu0 0.0
    %593 = vmatpush1.msra.mxu0 0.0
    %594 = vmatprep.subr.mxu0 0.0
    %595 = vmatpush1.msra.mxu0 0.0
    %596 = vmatprep.subr.mxu0 0.0
    %597 = vmatpush1.msra.mxu0 0.0
    %598 = vmatprep.subr.mxu0 0.0
    %599 = vmatpush1.msra.mxu0 0.0
    %600 = vmatprep.subr.mxu0 0.0
    %601 = vmatpush1.msra.mxu0 0.0
    %602 = vmatprep.subr.mxu0 0.0
    %603 = vmatpush1.msra.mxu0 0.0
    %604 = vmatprep.subr.mxu0 0.0
    %605 = vmatpush1.msra.mxu0 0.0
    %606 = vmatprep.subr.mxu0 0.0
    %607 = vmatpush1.msra.mxu0 0.0
    %608 = vmatprep.subr.mxu0 0.0
    %609 = vmatpush1.msra.mxu0 0.0
    %610 = vmatprep.subr.mxu0 0.0
    %611 = vmatpush1.msra.mxu0 0.0
    %612 = vmatprep.subr.mxu0 0.0
    %613 = vmatpush1.msra.mxu0 0.0
    %614 = vmatprep.subr.mxu0 0.0
    %615 = vmatpush1.msra.mxu0 0.0
    %616 = vmatprep.subr.mxu0 0.0
    %617 = vmatpush1.msra.mxu0 0.0
    %618 = vmatprep.subr.mxu0 0.0
    %619 = vmatpush1.msra.mxu0 0.0
    %620 = vmatprep.subr.mxu0 0.0
    %621 = vmatpush1.msra.mxu0 0.0
    %622 = vmatprep.subr.mxu0 0.0
    %623 = vmatpush1.msra.mxu0 0.0
    %624 = vmatprep.subr.mxu0 0.0
    %625 = vmatpush1.msra.mxu0 0.0
    %626 = vmatprep.subr.mxu0 0.0
    %627 = vmatpush1.msra.mxu0 0.0
    %628 = vmatprep.subr.mxu0 0.0
    %629 = vmatpush1.msra.mxu0 0.0
    %630 = vmatprep.subr.mxu0 0.0
    %631 = vmatpush1.msra.mxu0 0.0
    %632 = vmatprep.mubr.f32.mxu0 0.0
    %633 = vmatmul.mubr.f32.gmra.mrb[0].mxu0 %v566
    %v634 = vpop.f32.mrb[0].mxu0
    %v635 = vadd.f32 0.0, %v634
    %v636 = vpop.f32.mrb[0].mxu0
    %637 = vdwg.mxu0
    %v639 = vsel %vm234, %v393, 0
    %641 = vmatprep.subr.mxu0 0.0
    %642 = vmatpush1.msra.mxu0 %v396
    %643 = vmatprep.subr.mxu0 0.0
    %644 = vmatpush1.msra.mxu0 0.0
    %645 = vmatprep.subr.mxu0 0.0
    %646 = vmatpush1.msra.mxu0 0.0
    %647 = vmatprep.subr.mxu0 0.0
    %648 = vmatpush1.msra.mxu0 0.0
    %649 = vmatprep.subr.mxu0 0.0
    %650 = vmatpush1.msra.mxu0 0.0
    %651 = vmatprep.subr.mxu0 0.0
    %652 = vmatpush1.msra.mxu0 0.0
    %653 = vmatprep.subr.mxu0 0.0
    %654 = vmatpush1.msra.mxu0 0.0
    %655 = vmatprep.subr.mxu0 0.0
    %656 = vmatpush1.msra.mxu0 0.0
    %657 = vmatprep.subr.mxu0 0.0
    %658 = vmatpush1.msra.mxu0 0.0
    %659 = vmatprep.subr.mxu0 0.0
    %660 = vmatpush1.msra.mxu0 0.0
    %661 = vmatprep.subr.mxu0 0.0
    %662 = vmatpush1.msra.mxu0 0.0
    %663 = vmatprep.subr.mxu0 0.0
    %664 = vmatpush1.msra.mxu0 0.0
    %665 = vmatprep.subr.mxu0 0.0
    %666 = vmatpush1.msra.mxu0 0.0
    %667 = vmatprep.subr.mxu0 0.0
    %668 = vmatpush1.msra.mxu0 0.0
    %669 = vmatprep.subr.mxu0 0.0
    %670 = vmatpush1.msra.mxu0 0.0
    %671 = vmatprep.subr.mxu0 0.0
    %672 = vmatpush1.msra.mxu0 0.0
    %673 = vmatprep.subr.mxu0 0.0
    %674 = vmatpush1.msra.mxu0 0.0
    %675 = vmatprep.subr.mxu0 0.0
    %676 = vmatpush1.msra.mxu0 0.0
    %677 = vmatprep.subr.mxu0 0.0
    %678 = vmatpush1.msra.mxu0 0.0
    %679 = vmatprep.subr.mxu0 0.0
    %680 = vmatpush1.msra.mxu0 0.0
    %681 = vmatprep.subr.mxu0 0.0
    %682 = vmatpush1.msra.mxu0 0.0
    %683 = vmatprep.subr.mxu0 0.0
    %684 = vmatpush1.msra.mxu0 0.0
    %685 = vmatprep.subr.mxu0 0.0
    %686 = vmatpush1.msra.mxu0 0.0
    %687 = vmatprep.subr.mxu0 0.0
    %688 = vmatpush1.msra.mxu0 0.0
    %689 = vmatprep.subr.mxu0 0.0
    %690 = vmatpush1.msra.mxu0 0.0
    %691 = vmatprep.subr.mxu0 0.0
    %692 = vmatpush1.msra.mxu0 0.0
    %693 = vmatprep.subr.mxu0 0.0
    %694 = vmatpush1.msra.mxu0 0.0
    %695 = vmatprep.subr.mxu0 0.0
    %696 = vmatpush1.msra.mxu0 0.0
    %697 = vmatprep.subr.mxu0 0.0
    %698 = vmatpush1.msra.mxu0 0.0
    %699 = vmatprep.subr.mxu0 0.0
    %700 = vmatpush1.msra.mxu0 0.0
    %701 = vmatprep.subr.mxu0 0.0
    %702 = vmatpush1.msra.mxu0 0.0
    %703 = vmatprep.subr.mxu0 0.0
    %704 = vmatpush1.msra.mxu0 0.0
    %705 = vmatprep.mubr.f32.mxu0 0.0
    %706 = vmatmul.mubr.f32.gmra.mrb[0].mxu0 %v639
    %v707 = vpop.f32.mrb[0].mxu0
    %v708 = vadd.f32 %v635, %v707
    %v709 = vpop.f32.mrb[0].mxu0
    %710 = vdwg.mxu0
    %s711 = scalar_lea.vmem %s1, 16
    %v712 = vld [vmem:[%s711] sm:$0xff]
    %713 = vrot.lane.b32.xlu0 %v222, 112
    %v714 = vpop.permute.xlu0 %713
    %715 = vrot.lane.b32.xlu0 %v222, 80
    %v716 = vpop.permute.xlu0 %715
    %v717 = vsel %vm234, %v714, 0
    %v719 = vsel %vm234, %v716, 0
    %721 = vmatprep.subr.mxu0 0.0
    %722 = vmatpush1.xpose.msra.mxu0 %v719
    %723 = vmatprep.subr.mxu0 0.0
    %724 = vmatpush1.xpose.msra.mxu0 0.0
    %725 = vmatprep.subr.mxu0 0.0
    %726 = vmatpush1.xpose.msra.mxu0 0.0
    %727 = vmatprep.subr.mxu0 0.0
    %728 = vmatpush1.xpose.msra.mxu0 0.0
    %729 = vmatprep.subr.mxu0 0.0
    %730 = vmatpush1.xpose.msra.mxu0 0.0
    %731 = vmatprep.subr.mxu0 0.0
    %732 = vmatpush1.xpose.msra.mxu0 0.0
    %733 = vmatprep.subr.mxu0 0.0
    %734 = vmatpush1.xpose.msra.mxu0 0.0
    %735 = vmatprep.subr.mxu0 0.0
    %736 = vmatpush1.xpose.msra.mxu0 0.0
    %737 = vmatprep.subr.mxu0 0.0
    %738 = vmatpush1.xpose.msra.mxu0 0.0
    %739 = vmatprep.subr.mxu0 0.0
    %740 = vmatpush1.xpose.msra.mxu0 0.0
    %741 = vmatprep.subr.mxu0 0.0
    %742 = vmatpush1.xpose.msra.mxu0 0.0
    %743 = vmatprep.subr.mxu0 0.0
    %744 = vmatpush1.xpose.msra.mxu0 0.0
    %745 = vmatprep.subr.mxu0 0.0
    %746 = vmatpush1.xpose.msra.mxu0 0.0
    %747 = vmatprep.subr.mxu0 0.0
    %748 = vmatpush1.xpose.msra.mxu0 0.0
    %749 = vmatprep.subr.mxu0 0.0
    %750 = vmatpush1.xpose.msra.mxu0 0.0
    %751 = vmatprep.subr.mxu0 0.0
    %752 = vmatpush1.xpose.msra.mxu0 0.0
    %753 = vmatprep.subr.mxu0 0.0
    %754 = vmatpush1.xpose.msra.mxu0 0.0
    %755 = vmatprep.subr.mxu0 0.0
    %756 = vmatpush1.xpose.msra.mxu0 0.0
    %757 = vmatprep.subr.mxu0 0.0
    %758 = vmatpush1.xpose.msra.mxu0 0.0
    %759 = vmatprep.subr.mxu0 0.0
    %760 = vmatpush1.xpose.msra.mxu0 0.0
    %761 = vmatprep.subr.mxu0 0.0
    %762 = vmatpush1.xpose.msra.mxu0 0.0
    %763 = vmatprep.subr.mxu0 0.0
    %764 = vmatpush1.xpose.msra.mxu0 0.0
    %765 = vmatprep.subr.mxu0 0.0
    %766 = vmatpush1.xpose.msra.mxu0 0.0
    %767 = vmatprep.subr.mxu0 0.0
    %768 = vmatpush1.xpose.msra.mxu0 0.0
    %769 = vmatprep.subr.mxu0 0.0
    %770 = vmatpush1.xpose.msra.mxu0 0.0
    %771 = vmatprep.subr.mxu0 0.0
    %772 = vmatpush1.xpose.msra.mxu0 0.0
    %773 = vmatprep.subr.mxu0 0.0
    %774 = vmatpush1.xpose.msra.mxu0 0.0
    %775 = vmatprep.subr.mxu0 0.0
    %776 = vmatpush1.xpose.msra.mxu0 0.0
    %777 = vmatprep.subr.mxu0 0.0
    %778 = vmatpush1.xpose.msra.mxu0 0.0
    %779 = vmatprep.subr.mxu0 0.0
    %780 = vmatpush1.xpose.msra.mxu0 0.0
    %781 = vmatprep.subr.mxu0 0.0
    %782 = vmatpush1.xpose.msra.mxu0 0.0
    %783 = vmatprep.subr.mxu0 0.0
    %784 = vmatpush1.xpose.msra.mxu0 0.0
    %785 = vmatprep.mubr.f32.mxu0 0.0
    %786 = vmatmul.mubr.f32.gmra.mrb[0].mxu0 %v717
    %v787 = vpop.f32.mrb[0].mxu0
    %v788 = vadd.f32 %v712, %v787
    %v789 = vpop.f32.mrb[0].mxu0
    %790 = vdwg.mxu0
    %v791 = vsel %vm234, %v788, -inf
    %792 = vmax.xlane.f32.xlu0 %v791
    %v793 = vpop.xlane.xlu0 %792
    %v794 = vsub.f32 %v788, %v793
    %v795 = vmul.f32 %v794, 1.442695
    %v796 = vpow.pop %v795
    %v797 = vsel %vm234, %v796, 0.0
    %798 = vadd.xlane.f32.xlu0 %v797
    %v799 = vpop.xlane.xlu0 %798
    %v800 = vrcp.pop %v799
    %v801 = vmul.f32 %v796, %v800
    %802 = vrot.lane.b32.xlu0 %v222, 48
    %v803 = vpop.permute.xlu0 %802
    %v806 = vsel %vm234, %v801, 0
    %808 = vmatprep.subr.mxu0 0.0
    %809 = vmatpush1.msra.mxu0 %v803
    %810 = vmatprep.subr.mxu0 0.0
    %811 = vmatpush1.msra.mxu0 0.0
    %812 = vmatprep.subr.mxu0 0.0
    %813 = vmatpush1.msra.mxu0 0.0
    %814 = vmatprep.subr.mxu0 0.0
    %815 = vmatpush1.msra.mxu0 0.0
    %816 = vmatprep.subr.mxu0 0.0
    %817 = vmatpush1.msra.mxu0 0.0
    %818 = vmatprep.subr.mxu0 0.0
    %819 = vmatpush1.msra.mxu0 0.0
    %820 = vmatprep.subr.mxu0 0.0
    %821 = vmatpush1.msra.mxu0 0.0
    %822 = vmatprep.subr.mxu0 0.0
    %823 = vmatpush1.msra.mxu0 0.0
    %824 = vmatprep.subr.mxu0 0.0
    %825 = vmatpush1.msra.mxu0 0.0
    %826 = vmatprep.subr.mxu0 0.0
    %827 = vmatpush1.msra.mxu0 0.0
    %828 = vmatprep.subr.mxu0 0.0
    %829 = vmatpush1.msra.mxu0 0.0
    %830 = vmatprep.subr.mxu0 0.0
    %831 = vmatpush1.msra.mxu0 0.0
    %832 = vmatprep.subr.mxu0 0.0
    %833 = vmatpush1.msra.mxu0 0.0
    %834 = vmatprep.subr.mxu0 0.0
    %835 = vmatpush1.msra.mxu0 0.0
    %836 = vmatprep.subr.mxu0 0.0
    %837 = vmatpush1.msra.mxu0 0.0
    %838 = vmatprep.subr.mxu0 0.0
    %839 = vmatpush1.msra.mxu0 0.0
    %840 = vmatprep.subr.mxu0 0.0
    %841 = vmatpush1.msra.mxu0 0.0
    %842 = vmatprep.subr.mxu0 0.0
    %843 = vmatpush1.msra.mxu0 0.0
    %844 = vmatprep.subr.mxu0 0.0
    %845 = vmatpush1.msra.mxu0 0.0
    %846 = vmatprep.subr.mxu0 0.0
    %847 = vmatpush1.msra.mxu0 0.0
    %848 = vmatprep.subr.mxu0 0.0
    %849 = vmatpush1.msra.mxu0 0.0
    %850 = vmatprep.subr.mxu0 0.0
    %851 = vmatpush1.msra.mxu0 0.0
    %852 = vmatprep.subr.mxu0 0.0
    %853 = vmatpush1.msra.mxu0 0.0
    %854 = vmatprep.subr.mxu0 0.0
    %855 = vmatpush1.msra.mxu0 0.0
    %856 = vmatprep.subr.mxu0 0.0
    %857 = vmatpush1.msra.mxu0 0.0
    %858 = vmatprep.subr.mxu0 0.0
    %859 = vmatpush1.msra.mxu0 0.0
    %860 = vmatprep.subr.mxu0 0.0
    %861 = vmatpush1.msra.mxu0 0.0
    %862 = vmatprep.subr.mxu0 0.0
    %863 = vmatpush1.msra.mxu0 0.0
    %864 = vmatprep.subr.mxu0 0.0
    %865 = vmatpush1.msra.mxu0 0.0
    %866 = vmatprep.subr.mxu0 0.0
    %867 = vmatpush1.msra.mxu0 0.0
    %868 = vmatprep.subr.mxu0 0.0
    %869 = vmatpush1.msra.mxu0 0.0
    %870 = vmatprep.subr.mxu0 0.0
    %871 = vmatpush1.msra.mxu0 0.0
    %872 = vmatprep.mubr.f32.mxu0 0.0
    %873 = vmatmul.mubr.f32.gmra.mrb[0].mxu0 %v806
    %v874 = vpop.f32.mrb[0].mxu0
    %v875 = vadd.f32 0.0, %v874
    %v876 = vpop.f32.mrb[0].mxu0
    %877 = vdwg.mxu0
    %v878 = vld [vmem:[%s8 + $0x10] sm:$0xff]
    %v880 = vsel %vm234, %v875, 0
    %882 = vmatprep.subr.mxu0 0.0
    %883 = vmatpush1.msra.mxu0 %v878
    %884 = vmatprep.subr.mxu0 0.0
    %885 = vmatpush1.msra.mxu0 0.0
    %886 = vmatprep.subr.mxu0 0.0
    %887 = vmatpush1.msra.mxu0 0.0
    %888 = vmatprep.subr.mxu0 0.0
    %889 = vmatpush1.msra.mxu0 0.0
    %890 = vmatprep.subr.mxu0 0.0
    %891 = vmatpush1.msra.mxu0 0.0
    %892 = vmatprep.subr.mxu0 0.0
    %893 = vmatpush1.msra.mxu0 0.0
    %894 = vmatprep.subr.mxu0 0.0
    %895 = vmatpush1.msra.mxu0 0.0
    %896 = vmatprep.subr.mxu0 0.0
    %897 = vmatpush1.msra.mxu0 0.0
    %898 = vmatprep.subr.mxu0 0.0
    %899 = vmatpush1.msra.mxu0 0.0
    %900 = vmatprep.subr.mxu0 0.0
    %901 = vmatpush1.msra.mxu0 0.0
    %902 = vmatprep.subr.mxu0 0.0
    %903 = vmatpush1.msra.mxu0 0.0
    %904 = vmatprep.subr.mxu0 0.0
    %905 = vmatpush1.msra.mxu0 0.0
    %906 = vmatprep.subr.mxu0 0.0
    %907 = vmatpush1.msra.mxu0 0.0
    %908 = vmatprep.subr.mxu0 0.0
    %909 = vmatpush1.msra.mxu0 0.0
    %910 = vmatprep.subr.mxu0 0.0
    %911 = vmatpush1.msra.mxu0 0.0
    %912 = vmatprep.subr.mxu0 0.0
    %913 = vmatpush1.msra.mxu0 0.0
    %914 = vmatprep.subr.mxu0 0.0
    %915 = vmatpush1.msra.mxu0 0.0
    %916 = vmatprep.subr.mxu0 0.0
    %917 = vmatpush1.msra.mxu0 0.0
    %918 = vmatprep.subr.mxu0 0.0
    %919 = vmatpush1.msra.mxu0 0.0
    %920 = vmatprep.subr.mxu0 0.0
    %921 = vmatpush1.msra.mxu0 0.0
    %922 = vmatprep.subr.mxu0 0.0
    %923 = vmatpush1.msra.mxu0 0.0
    %924 = vmatprep.subr.mxu0 0.0
    %925 = vmatpush1.msra.mxu0 0.0
    %926 = vmatprep.subr.mxu0 0.0
    %927 = vmatpush1.msra.mxu0 0.0
    %928 = vmatprep.subr.mxu0 0.0
    %929 = vmatpush1.msra.mxu0 0.0
    %930 = vmatprep.subr.mxu0 0.0
    %931 = vmatpush1.msra.mxu0 0.0
    %932 = vmatprep.subr.mxu0 0.0
    %933 = vmatpush1.msra.mxu0 0.0
    %934 = vmatprep.subr.mxu0 0.0
    %935 = vmatpush1.msra.mxu0 0.0
    %936 = vmatprep.subr.mxu0 0.0
    %937 = vmatpush1.msra.mxu0 0.0
    %938 = vmatprep.subr.mxu0 0.0
    %939 = vmatpush1.msra.mxu0 0.0
    %940 = vmatprep.subr.mxu0 0.0
    %941 = vmatpush1.msra.mxu0 0.0
    %942 = vmatprep.subr.mxu0 0.0
    %943 = vmatpush1.msra.mxu0 0.0
    %944 = vmatprep.subr.mxu0 0.0
    %945 = vmatpush1.msra.mxu0 0.0
    %946 = vmatprep.mubr.f32.mxu0 0.0
    %947 = vmatmul.mubr.f32.gmra.mrb[0].mxu0 %v880
    %v948 = vpop.f32.mrb[0].mxu0
    %v949 = vadd.f32 0.0, %v948
    %v950 = vpop.f32.mrb[0].mxu0
    %951 = vdwg.mxu0
    %v952 = vadd.f32 %v708, %v949
    %s953 = scalar_lea.vmem %s1, 24
    %v954 = vld [vmem:[%s953] sm:$0xff]
    %955 = vrot.lane.b32.xlu0 %v222, 104
    %v956 = vpop.permute.xlu0 %955
    %957 = vrot.lane.b32.xlu0 %v222, 72
    %v958 = vpop.permute.xlu0 %957
    %v959 = vsel %vm234, %v956, 0
    %v961 = vsel %vm234, %v958, 0
    %963 = vmatprep.subr.mxu0 0.0
    %964 = vmatpush1.xpose.msra.mxu0 %v961
    %965 = vmatprep.subr.mxu0 0.0
    %966 = vmatpush1.xpose.msra.mxu0 0.0
    %967 = vmatprep.subr.mxu0 0.0
    %968 = vmatpush1.xpose.msra.mxu0 0.0
    %969 = vmatprep.subr.mxu0 0.0
    %970 = vmatpush1.xpose.msra.mxu0 0.0
    %971 = vmatprep.subr.mxu0 0.0
    %972 = vmatpush1.xpose.msra.mxu0 0.0
    %973 = vmatprep.subr.mxu0 0.0
    %974 = vmatpush1.xpose.msra.mxu0 0.0
    %975 = vmatprep.subr.mxu0 0.0
    %976 = vmatpush1.xpose.msra.mxu0 0.0
    %977 = vmatprep.subr.mxu0 0.0
    %978 = vmatpush1.xpose.msra.mxu0 0.0
    %979 = vmatprep.subr.mxu0 0.0
    %980 = vmatpush1.xpose.msra.mxu0 0.0
    %981 = vmatprep.subr.mxu0 0.0
    %982 = vmatpush1.xpose.msra.mxu0 0.0
    %983 = vmatprep.subr.mxu0 0.0
    %984 = vmatpush1.xpose.msra.mxu0 0.0
    %985 = vmatprep.subr.mxu0 0.0
    %986 = vmatpush1.xpose.msra.mxu0 0.0
    %987 = vmatprep.subr.mxu0 0.0
    %988 = vmatpush1.xpose.msra.mxu0 0.0
    %989 = vmatprep.subr.mxu0 0.0
    %990 = vmatpush1.xpose.msra.mxu0 0.0
    %991 = vmatprep.subr.mxu0 0.0
    %992 = vmatpush1.xpose.msra.mxu0 0.0
    %993 = vmatprep.subr.mxu0 0.0
    %994 = vmatpush1.xpose.msra.mxu0 0.0
    %995 = vmatprep.subr.mxu0 0.0
    %996 = vmatpush1.xpose.msra.mxu0 0.0
    %997 = vmatprep.subr.mxu0 0.0
    %998 = vmatpush1.xpose.msra.mxu0 0.0
    %999 = vmatprep.subr.mxu0 0.0
    %1000 = vmatpush1.xpose.msra.mxu0 0.0
    %1001 = vmatprep.subr.mxu0 0.0
    %1002 = vmatpush1.xpose.msra.mxu0 0.0
    %1003 = vmatprep.subr.mxu0 0.0
    %1004 = vmatpush1.xpose.msra.mxu0 0.0
    %1005 = vmatprep.subr.mxu0 0.0
    %1006 = vmatpush1.xpose.msra.mxu0 0.0
    %1007 = vmatprep.subr.mxu0 0.0
    %1008 = vmatpush1.xpose.msra.mxu0 0.0
    %1009 = vmatprep.subr.mxu0 0.0
    %1010 = vmatpush1.xpose.msra.mxu0 0.0
    %1011 = vmatprep.subr.mxu0 0.0
    %1012 = vmatpush1.xpose.msra.mxu0 0.0
    %1013 = vmatprep.subr.mxu0 0.0
    %1014 = vmatpush1.xpose.msra.mxu0 0.0
    %1015 = vmatprep.subr.mxu0 0.0
    %1016 = vmatpush1.xpose.msra.mxu0 0.0
    %1017 = vmatprep.subr.mxu0 0.0
    %1018 = vmatpush1.xpose.msra.mxu0 0.0
    %1019 = vmatprep.subr.mxu0 0.0
    %1020 = vmatpush1.xpose.msra.mxu0 0.0
    %1021 = vmatprep.subr.mxu0 0.0
    %1022 = vmatpush1.xpose.msra.mxu0 0.0
    %1023 = vmatprep.subr.mxu0 0.0
    %1024 = vmatpush1.xpose.msra.mxu0 0.0
    %1025 = vmatprep.subr.mxu0 0.0
    %1026 = vmatpush1.xpose.msra.mxu0 0.0
    %1027 = vmatprep.mubr.f32.mxu0 0.0
    %1028 = vmatmul.mubr.f32.gmra.mrb[0].mxu0 %v959
    %v1029 = vpop.f32.mrb[0].mxu0
    %v1030 = vadd.f32 %v954, %v1029
    %v1031 = vpop.f32.mrb[0].mxu0
    %1032 = vdwg.mxu0
    %v1033 = vsel %vm234, %v1030, -inf
    %1034 = vmax.xlane.f32.xlu0 %v1033
    %v1035 = vpop.xlane.xlu0 %1034
    %v1036 = vsub.f32 %v1030, %v1035
    %v1037 = vmul.f32 %v1036, 1.442695
    %v1038 = vpow.pop %v1037
    %v1039 = vsel %vm234, %v1038, 0.0
    %1040 = vadd.xlane.f32.xlu0 %v1039
    %v1041 = vpop.xlane.xlu0 %1040
    %v1042 = vrcp.pop %v1041
    %v1043 = vmul.f32 %v1038, %v1042
    %1044 = vrot.lane.b32.xlu0 %v222, 40
    %v1045 = vpop.permute.xlu0 %1044
    %v1048 = vsel %vm234, %v1043, 0
    %1050 = vmatprep.subr.mxu0 0.0
    %1051 = vmatpush1.msra.mxu0 %v1045
    %1052 = vmatprep.subr.mxu0 0.0
    %1053 = vmatpush1.msra.mxu0 0.0
    %1054 = vmatprep.subr.mxu0 0.0
    %1055 = vmatpush1.msra.mxu0 0.0
    %1056 = vmatprep.subr.mxu0 0.0
    %1057 = vmatpush1.msra.mxu0 0.0
    %1058 = vmatprep.subr.mxu0 0.0
    %1059 = vmatpush1.msra.mxu0 0.0
    %1060 = vmatprep.subr.mxu0 0.0
    %1061 = vmatpush1.msra.mxu0 0.0
    %1062 = vmatprep.subr.mxu0 0.0
    %1063 = vmatpush1.msra.mxu0 0.0
    %1064 = vmatprep.subr.mxu0 0.0
    %1065 = vmatpush1.msra.mxu0 0.0
    %1066 = vmatprep.subr.mxu0 0.0
    %1067 = vmatpush1.msra.mxu0 0.0
    %1068 = vmatprep.subr.mxu0 0.0
    %1069 = vmatpush1.msra.mxu0 0.0
    %1070 = vmatprep.subr.mxu0 0.0
    %1071 = vmatpush1.msra.mxu0 0.0
    %1072 = vmatprep.subr.mxu0 0.0
    %1073 = vmatpush1.msra.mxu0 0.0
    %1074 = vmatprep.subr.mxu0 0.0
    %1075 = vmatpush1.msra.mxu0 0.0
    %1076 = vmatprep.subr.mxu0 0.0
    %1077 = vmatpush1.msra.mxu0 0.0
    %1078 = vmatprep.subr.mxu0 0.0
    %1079 = vmatpush1.msra.mxu0 0.0
    %1080 = vmatprep.subr.mxu0 0.0
    %1081 = vmatpush1.msra.mxu0 0.0
    %1082 = vmatprep.subr.mxu0 0.0
    %1083 = vmatpush1.msra.mxu0 0.0
    %1084 = vmatprep.subr.mxu0 0.0
    %1085 = vmatpush1.msra.mxu0 0.0
    %1086 = vmatprep.subr.mxu0 0.0
    %1087 = vmatpush1.msra.mxu0 0.0
    %1088 = vmatprep.subr.mxu0 0.0
    %1089 = vmatpush1.msra.mxu0 0.0
    %1090 = vmatprep.subr.mxu0 0.0
    %1091 = vmatpush1.msra.mxu0 0.0
    %1092 = vmatprep.subr.mxu0 0.0
    %1093 = vmatpush1.msra.mxu0 0.0
    %1094 = vmatprep.subr.mxu0 0.0
    %1095 = vmatpush1.msra.mxu0 0.0
    %1096 = vmatprep.subr.mxu0 0.0
    %1097 = vmatpush1.msra.mxu0 0.0
    %1098 = vmatprep.subr.mxu0 0.0
    %1099 = vmatpush1.msra.mxu0 0.0
    %1100 = vmatprep.subr.mxu0 0.0
    %1101 = vmatpush1.msra.mxu0 0.0
    %1102 = vmatprep.subr.mxu0 0.0
    %1103 = vmatpush1.msra.mxu0 0.0
    %1104 = vmatprep.subr.mxu0 0.0
    %1105 = vmatpush1.msra.mxu0 0.0
    %1106 = vmatprep.subr.mxu0 0.0
    %1107 = vmatpush1.msra.mxu0 0.0
    %1108 = vmatprep.subr.mxu0 0.0
    %1109 = vmatpush1.msra.mxu0 0.0
    %1110 = vmatprep.subr.mxu0 0.0
    %1111 = vmatpush1.msra.mxu0 0.0
    %1112 = vmatprep.subr.mxu0 0.0
    %1113 = vmatpush1.msra.mxu0 0.0
    %1114 = vmatprep.mubr.f32.mxu0 0.0
    %1115 = vmatmul.mubr.f32.gmra.mrb[0].mxu0 %v1048
    %v1116 = vpop.f32.mrb[0].mxu0
    %v1117 = vadd.f32 0.0, %v1116
    %v1118 = vpop.f32.mrb[0].mxu0
    %1119 = vdwg.mxu0
    %v1120 = vld [vmem:[%s8 + $0x18] sm:$0xff]
    %v1122 = vsel %vm234, %v1117, 0
    %1124 = vmatprep.subr.mxu0 0.0
    %1125 = vmatpush1.msra.mxu0 %v1120
    %1126 = vmatprep.subr.mxu0 0.0
    %1127 = vmatpush1.msra.mxu0 0.0
    %1128 = vmatprep.subr.mxu0 0.0
    %1129 = vmatpush1.msra.mxu0 0.0
    %1130 = vmatprep.subr.mxu0 0.0
    %1131 = vmatpush1.msra.mxu0 0.0
    %1132 = vmatprep.subr.mxu0 0.0
    %1133 = vmatpush1.msra.mxu0 0.0
    %1134 = vmatprep.subr.mxu0 0.0
    %1135 = vmatpush1.msra.mxu0 0.0
    %1136 = vmatprep.subr.mxu0 0.0
    %1137 = vmatpush1.msra.mxu0 0.0
    %1138 = vmatprep.subr.mxu0 0.0
    %1139 = vmatpush1.msra.mxu0 0.0
    %1140 = vmatprep.subr.mxu0 0.0
    %1141 = vmatpush1.msra.mxu0 0.0
    %1142 = vmatprep.subr.mxu0 0.0
    %1143 = vmatpush1.msra.mxu0 0.0
    %1144 = vmatprep.subr.mxu0 0.0
    %1145 = vmatpush1.msra.mxu0 0.0
    %1146 = vmatprep.subr.mxu0 0.0
    %1147 = vmatpush1.msra.mxu0 0.0
    %1148 = vmatprep.subr.mxu0 0.0
    %1149 = vmatpush1.msra.mxu0 0.0
    %1150 = vmatprep.subr.mxu0 0.0
    %1151 = vmatpush1.msra.mxu0 0.0
    %1152 = vmatprep.subr.mxu0 0.0
    %1153 = vmatpush1.msra.mxu0 0.0
    %1154 = vmatprep.subr.mxu0 0.0
    %1155 = vmatpush1.msra.mxu0 0.0
    %1156 = vmatprep.subr.mxu0 0.0
    %1157 = vmatpush1.msra.mxu0 0.0
    %1158 = vmatprep.subr.mxu0 0.0
    %1159 = vmatpush1.msra.mxu0 0.0
    %1160 = vmatprep.subr.mxu0 0.0
    %1161 = vmatpush1.msra.mxu0 0.0
    %1162 = vmatprep.subr.mxu0 0.0
    %1163 = vmatpush1.msra.mxu0 0.0
    %1164 = vmatprep.subr.mxu0 0.0
    %1165 = vmatpush1.msra.mxu0 0.0
    %1166 = vmatprep.subr.mxu0 0.0
    %1167 = vmatpush1.msra.mxu0 0.0
    %1168 = vmatprep.subr.mxu0 0.0
    %1169 = vmatpush1.msra.mxu0 0.0
    %1170 = vmatprep.subr.mxu0 0.0
    %1171 = vmatpush1.msra.mxu0 0.0
    %1172 = vmatprep.subr.mxu0 0.0
    %1173 = vmatpush1.msra.mxu0 0.0
    %1174 = vmatprep.subr.mxu0 0.0
    %1175 = vmatpush1.msra.mxu0 0.0
    %1176 = vmatprep.subr.mxu0 0.0
    %1177 = vmatpush1.msra.mxu0 0.0
    %1178 = vmatprep.subr.mxu0 0.0
    %1179 = vmatpush1.msra.mxu0 0.0
    %1180 = vmatprep.subr.mxu0 0.0
    %1181 = vmatpush1.msra.mxu0 0.0
    %1182 = vmatprep.subr.mxu0 0.0
    %1183 = vmatpush1.msra.mxu0 0.0
    %1184 = vmatprep.subr.mxu0 0.0
    %1185 = vmatpush1.msra.mxu0 0.0
    %1186 = vmatprep.subr.mxu0 0.0
    %1187 = vmatpush1.msra.mxu0 0.0
    %1188 = vmatprep.mubr.f32.mxu0 0.0
    %1189 = vmatmul.mubr.f32.gmra.mrb[0].mxu0 %v1122
    %v1190 = vpop.f32.mrb[0].mxu0
    %v1191 = vadd.f32 0.0, %v1190
    %v1192 = vpop.f32.mrb[0].mxu0
    %1193 = vdwg.mxu0
    %v1194 = vadd.f32 %v952, %v1191
    %1196 = vrot.lane.b32.xlu0 %v227, 96
    %v1197 = vpop.permute.xlu0 %1196
    %v1198 = vsel %vm234, %v227, 0
    %v1200 = vsel %vm234, %v1197, 0
    %1202 = vmatprep.subr.mxu0 0.0
    %1203 = vmatpush1.xpose.msra.mxu0 %v1200
    %1204 = vmatprep.subr.mxu0 0.0
    %1205 = vmatpush1.xpose.msra.mxu0 0.0
    %1206 = vmatprep.subr.mxu0 0.0
    %1207 = vmatpush1.xpose.msra.mxu0 0.0
    %1208 = vmatprep.subr.mxu0 0.0
    %1209 = vmatpush1.xpose.msra.mxu0 0.0
    %1210 = vmatprep.subr.mxu0 0.0
    %1211 = vmatpush1.xpose.msra.mxu0 0.0
    %1212 = vmatprep.subr.mxu0 0.0
    %1213 = vmatpush1.xpose.msra.mxu0 0.0
    %1214 = vmatprep.subr.mxu0 0.0
    %1215 = vmatpush1.xpose.msra.mxu0 0.0
    %1216 = vmatprep.subr.mxu0 0.0
    %1217 = vmatpush1.xpose.msra.mxu0 0.0
    %1218 = vmatprep.subr.mxu0 0.0
    %1219 = vmatpush1.xpose.msra.mxu0 0.0
    %1220 = vmatprep.subr.mxu0 0.0
    %1221 = vmatpush1.xpose.msra.mxu0 0.0
    %1222 = vmatprep.subr.mxu0 0.0
    %1223 = vmatpush1.xpose.msra.mxu0 0.0
    %1224 = vmatprep.subr.mxu0 0.0
    %1225 = vmatpush1.xpose.msra.mxu0 0.0
    %1226 = vmatprep.subr.mxu0 0.0
    %1227 = vmatpush1.xpose.msra.mxu0 0.0
    %1228 = vmatprep.subr.mxu0 0.0
    %1229 = vmatpush1.xpose.msra.mxu0 0.0
    %1230 = vmatprep.subr.mxu0 0.0
    %1231 = vmatpush1.xpose.msra.mxu0 0.0
    %1232 = vmatprep.subr.mxu0 0.0
    %1233 = vmatpush1.xpose.msra.mxu0 0.0
    %1234 = vmatprep.subr.mxu0 0.0
    %1235 = vmatpush1.xpose.msra.mxu0 0.0
    %1236 = vmatprep.subr.mxu0 0.0
    %1237 = vmatpush1.xpose.msra.mxu0 0.0
    %1238 = vmatprep.subr.mxu0 0.0
    %1239 = vmatpush1.xpose.msra.mxu0 0.0
    %1240 = vmatprep.subr.mxu0 0.0
    %1241 = vmatpush1.xpose.msra.mxu0 0.0
    %1242 = vmatprep.subr.mxu0 0.0
    %1243 = vmatpush1.xpose.msra.mxu0 0.0
    %1244 = vmatprep.subr.mxu0 0.0
    %1245 = vmatpush1.xpose.msra.mxu0 0.0
    %1246 = vmatprep.subr.mxu0 0.0
    %1247 = vmatpush1.xpose.msra.mxu0 0.0
    %1248 = vmatprep.subr.mxu0 0.0
    %1249 = vmatpush1.xpose.msra.mxu0 0.0
    %1250 = vmatprep.subr.mxu0 0.0
    %1251 = vmatpush1.xpose.msra.mxu0 0.0
    %1252 = vmatprep.subr.mxu0 0.0
    %1253 = vmatpush1.xpose.msra.mxu0 0.0
    %1254 = vmatprep.subr.mxu0 0.0
    %1255 = vmatpush1.xpose.msra.mxu0 0.0
    %1256 = vmatprep.subr.mxu0 0.0
    %1257 = vmatpush1.xpose.msra.mxu0 0.0
    %1258 = vmatprep.subr.mxu0 0.0
    %1259 = vmatpush1.xpose.msra.mxu0 0.0
    %1260 = vmatprep.subr.mxu0 0.0
    %1261 = vmatpush1.xpose.msra.mxu0 0.0
    %1262 = vmatprep.subr.mxu0 0.0
    %1263 = vmatpush1.xpose.msra.mxu0 0.0
    %1264 = vmatprep.subr.mxu0 0.0
    %1265 = vmatpush1.xpose.msra.mxu0 0.0
    %1266 = vmatprep.mubr.f32.mxu0 0.0
    %1267 = vmatmul.mubr.f32.gmra.mrb[0].mxu0 %v1198
    %v1268 = vpop.f32.mrb[0].mxu0
    %v1269 = vadd.f32 %v230, %v1268
    %v1270 = vpop.f32.mrb[0].mxu0
    %1271 = vdwg.mxu0
    %v1272 = vsel %vm234, %v1269, -inf
    %1273 = vmax.xlane.f32.xlu0 %v1272
    %v1274 = vpop.xlane.xlu0 %1273
    %v1275 = vsub.f32 %v1269, %v1274
    %v1276 = vmul.f32 %v1275, 1.442695
    %v1277 = vpow.pop %v1276
    %v1278 = vsel %vm234, %v1277, 0.0
    %1279 = vadd.xlane.f32.xlu0 %v1278
    %v1280 = vpop.xlane.xlu0 %1279
    %v1281 = vrcp.pop %v1280
    %v1282 = vmul.f32 %v1277, %v1281
    %1283 = vrot.lane.b32.xlu0 %v227, 64
    %v1284 = vpop.permute.xlu0 %1283
    %v1287 = vsel %vm234, %v1282, 0
    %1289 = vmatprep.subr.mxu0 0.0
    %1290 = vmatpush1.msra.mxu0 %v1284
    %1291 = vmatprep.subr.mxu0 0.0
    %1292 = vmatpush1.msra.mxu0 0.0
    %1293 = vmatprep.subr.mxu0 0.0
    %1294 = vmatpush1.msra.mxu0 0.0
    %1295 = vmatprep.subr.mxu0 0.0
    %1296 = vmatpush1.msra.mxu0 0.0
    %1297 = vmatprep.subr.mxu0 0.0
    %1298 = vmatpush1.msra.mxu0 0.0
    %1299 = vmatprep.subr.mxu0 0.0
    %1300 = vmatpush1.msra.mxu0 0.0
    %1301 = vmatprep.subr.mxu0 0.0
    %1302 = vmatpush1.msra.mxu0 0.0
    %1303 = vmatprep.subr.mxu0 0.0
    %1304 = vmatpush1.msra.mxu0 0.0
    %1305 = vmatprep.subr.mxu0 0.0
    %1306 = vmatpush1.msra.mxu0 0.0
    %1307 = vmatprep.subr.mxu0 0.0
    %1308 = vmatpush1.msra.mxu0 0.0
    %1309 = vmatprep.subr.mxu0 0.0
    %1310 = vmatpush1.msra.mxu0 0.0
    %1311 = vmatprep.subr.mxu0 0.0
    %1312 = vmatpush1.msra.mxu0 0.0
    %1313 = vmatprep.subr.mxu0 0.0
    %1314 = vmatpush1.msra.mxu0 0.0
    %1315 = vmatprep.subr.mxu0 0.0
    %1316 = vmatpush1.msra.mxu0 0.0
    %1317 = vmatprep.subr.mxu0 0.0
    %1318 = vmatpush1.msra.mxu0 0.0
    %1319 = vmatprep.subr.mxu0 0.0
    %1320 = vmatpush1.msra.mxu0 0.0
    %1321 = vmatprep.subr.mxu0 0.0
    %1322 = vmatpush1.msra.mxu0 0.0
    %1323 = vmatprep.subr.mxu0 0.0
    %1324 = vmatpush1.msra.mxu0 0.0
    %1325 = vmatprep.subr.mxu0 0.0
    %1326 = vmatpush1.msra.mxu0 0.0
    %1327 = vmatprep.subr.mxu0 0.0
    %1328 = vmatpush1.msra.mxu0 0.0
    %1329 = vmatprep.subr.mxu0 0.0
    %1330 = vmatpush1.msra.mxu0 0.0
    %1331 = vmatprep.subr.mxu0 0.0
    %1332 = vmatpush1.msra.mxu0 0.0
    %1333 = vmatprep.subr.mxu0 0.0
    %1334 = vmatpush1.msra.mxu0 0.0
    %1335 = vmatprep.subr.mxu0 0.0
    %1336 = vmatpush1.msra.mxu0 0.0
    %1337 = vmatprep.subr.mxu0 0.0
    %1338 = vmatpush1.msra.mxu0 0.0
    %1339 = vmatprep.subr.mxu0 0.0
    %1340 = vmatpush1.msra.mxu0 0.0
    %1341 = vmatprep.subr.mxu0 0.0
    %1342 = vmatpush1.msra.mxu0 0.0
    %1343 = vmatprep.subr.mxu0 0.0
    %1344 = vmatpush1.msra.mxu0 0.0
    %1345 = vmatprep.subr.mxu0 0.0
    %1346 = vmatpush1.msra.mxu0 0.0
    %1347 = vmatprep.subr.mxu0 0.0
    %1348 = vmatpush1.msra.mxu0 0.0
    %1349 = vmatprep.subr.mxu0 0.0
    %1350 = vmatpush1.msra.mxu0 0.0
    %1351 = vmatprep.subr.mxu0 0.0
    %1352 = vmatpush1.msra.mxu0 0.0
    %1353 = vmatprep.mubr.f32.mxu0 0.0
    %1354 = vmatmul.mubr.f32.gmra.mrb[0].mxu0 %v1287
    %v1355 = vpop.f32.mrb[0].mxu0
    %v1356 = vadd.f32 0.0, %v1355
    %v1357 = vpop.f32.mrb[0].mxu0
    %1358 = vdwg.mxu0
    %1359 = vrot.lane.b32.xlu0 %v227, 120
    %v1360 = vpop.permute.xlu0 %1359
    %1361 = vrot.lane.b32.xlu0 %v227, 88
    %v1362 = vpop.permute.xlu0 %1361
    %v1363 = vsel %vm234, %v1360, 0
    %v1365 = vsel %vm234, %v1362, 0
    %1367 = vmatprep.subr.mxu0 0.0
    %1368 = vmatpush1.xpose.msra.mxu0 %v1365
    %1369 = vmatprep.subr.mxu0 0.0
    %1370 = vmatpush1.xpose.msra.mxu0 0.0
    %1371 = vmatprep.subr.mxu0 0.0
    %1372 = vmatpush1.xpose.msra.mxu0 0.0
    %1373 = vmatprep.subr.mxu0 0.0
    %1374 = vmatpush1.xpose.msra.mxu0 0.0
    %1375 = vmatprep.subr.mxu0 0.0
    %1376 = vmatpush1.xpose.msra.mxu0 0.0
    %1377 = vmatprep.subr.mxu0 0.0
    %1378 = vmatpush1.xpose.msra.mxu0 0.0
    %1379 = vmatprep.subr.mxu0 0.0
    %1380 = vmatpush1.xpose.msra.mxu0 0.0
    %1381 = vmatprep.subr.mxu0 0.0
    %1382 = vmatpush1.xpose.msra.mxu0 0.0
    %1383 = vmatprep.subr.mxu0 0.0
    %1384 = vmatpush1.xpose.msra.mxu0 0.0
    %1385 = vmatprep.subr.mxu0 0.0
    %1386 = vmatpush1.xpose.msra.mxu0 0.0
    %1387 = vmatprep.subr.mxu0 0.0
    %1388 = vmatpush1.xpose.msra.mxu0 0.0
    %1389 = vmatprep.subr.mxu0 0.0
    %1390 = vmatpush1.xpose.msra.mxu0 0.0
    %1391 = vmatprep.subr.mxu0 0.0
    %1392 = vmatpush1.xpose.msra.mxu0 0.0
    %1393 = vmatprep.subr.mxu0 0.0
    %1394 = vmatpush1.xpose.msra.mxu0 0.0
    %1395 = vmatprep.subr.mxu0 0.0
    %1396 = vmatpush1.xpose.msra.mxu0 0.0
    %1397 = vmatprep.subr.mxu0 0.0
    %1398 = vmatpush1.xpose.msra.mxu0 0.0
    %1399 = vmatprep.subr.mxu0 0.0
    %1400 = vmatpush1.xpose.msra.mxu0 0.0
    %1401 = vmatprep.subr.mxu0 0.0
    %1402 = vmatpush1.xpose.msra.mxu0 0.0
    %1403 = vmatprep.subr.mxu0 0.0
    %1404 = vmatpush1.xpose.msra.mxu0 0.0
    %1405 = vmatprep.subr.mxu0 0.0
    %1406 = vmatpush1.xpose.msra.mxu0 0.0
    %1407 = vmatprep.subr.mxu0 0.0
    %1408 = vmatpush1.xpose.msra.mxu0 0.0
    %1409 = vmatprep.subr.mxu0 0.0
    %1410 = vmatpush1.xpose.msra.mxu0 0.0
    %1411 = vmatprep.subr.mxu0 0.0
    %1412 = vmatpush1.xpose.msra.mxu0 0.0
    %1413 = vmatprep.subr.mxu0 0.0
    %1414 = vmatpush1.xpose.msra.mxu0 0.0
    %1415 = vmatprep.subr.mxu0 0.0
    %1416 = vmatpush1.xpose.msra.mxu0 0.0
    %1417 = vmatprep.subr.mxu0 0.0
    %1418 = vmatpush1.xpose.msra.mxu0 0.0
    %1419 = vmatprep.subr.mxu0 0.0
    %1420 = vmatpush1.xpose.msra.mxu0 0.0
    %1421 = vmatprep.subr.mxu0 0.0
    %1422 = vmatpush1.xpose.msra.mxu0 0.0
    %1423 = vmatprep.subr.mxu0 0.0
    %1424 = vmatpush1.xpose.msra.mxu0 0.0
    %1425 = vmatprep.subr.mxu0 0.0
    %1426 = vmatpush1.xpose.msra.mxu0 0.0
    %1427 = vmatprep.subr.mxu0 0.0
    %1428 = vmatpush1.xpose.msra.mxu0 0.0
    %1429 = vmatprep.subr.mxu0 0.0
    %1430 = vmatpush1.xpose.msra.mxu0 0.0
    %1431 = vmatprep.mubr.f32.mxu0 0.0
    %1432 = vmatmul.mubr.f32.gmra.mrb[0].mxu0 %v1363
    %v1433 = vpop.f32.mrb[0].mxu0
    %v1434 = vadd.f32 %v398, %v1433
    %v1435 = vpop.f32.mrb[0].mxu0
    %1436 = vdwg.mxu0
    %v1437 = vsel %vm234, %v1434, -inf
    %1438 = vmax.xlane.f32.xlu0 %v1437
    %v1439 = vpop.xlane.xlu0 %1438
    %v1440 = vsub.f32 %v1434, %v1439
    %v1441 = vmul.f32 %v1440, 1.442695
    %v1442 = vpow.pop %v1441
    %v1443 = vsel %vm234, %v1442, 0.0
    %1444 = vadd.xlane.f32.xlu0 %v1443
    %v1445 = vpop.xlane.xlu0 %1444
    %v1446 = vrcp.pop %v1445
    %v1447 = vmul.f32 %v1442, %v1446
    %1448 = vrot.lane.b32.xlu0 %v227, 56
    %v1449 = vpop.permute.xlu0 %1448
    %v1452 = vsel %vm234, %v1447, 0
    %1454 = vmatprep.subr.mxu0 0.0
    %1455 = vmatpush1.msra.mxu0 %v1449
    %1456 = vmatprep.subr.mxu0 0.0
    %1457 = vmatpush1.msra.mxu0 0.0
    %1458 = vmatprep.subr.mxu0 0.0
    %1459 = vmatpush1.msra.mxu0 0.0
    %1460 = vmatprep.subr.mxu0 0.0
    %1461 = vmatpush1.msra.mxu0 0.0
    %1462 = vmatprep.subr.mxu0 0.0
    %1463 = vmatpush1.msra.mxu0 0.0
    %1464 = vmatprep.subr.mxu0 0.0
    %1465 = vmatpush1.msra.mxu0 0.0
    %1466 = vmatprep.subr.mxu0 0.0
    %1467 = vmatpush1.msra.mxu0 0.0
    %1468 = vmatprep.subr.mxu0 0.0
    %1469 = vmatpush1.msra.mxu0 0.0
    %1470 = vmatprep.subr.mxu0 0.0
    %1471 = vmatpush1.msra.mxu0 0.0
    %1472 = vmatprep.subr.mxu0 0.0
    %1473 = vmatpush1.msra.mxu0 0.0
    %1474 = vmatprep.subr.mxu0 0.0
    %1475 = vmatpush1.msra.mxu0 0.0
    %1476 = vmatprep.subr.mxu0 0.0
    %1477 = vmatpush1.msra.mxu0 0.0
    %1478 = vmatprep.subr.mxu0 0.0
    %1479 = vmatpush1.msra.mxu0 0.0
    %1480 = vmatprep.subr.mxu0 0.0
    %1481 = vmatpush1.msra.mxu0 0.0
    %1482 = vmatprep.subr.mxu0 0.0
    %1483 = vmatpush1.msra.mxu0 0.0
    %1484 = vmatprep.subr.mxu0 0.0
    %1485 = vmatpush1.msra.mxu0 0.0
    %1486 = vmatprep.subr.mxu0 0.0
    %1487 = vmatpush1.msra.mxu0 0.0
    %1488 = vmatprep.subr.mxu0 0.0
    %1489 = vmatpush1.msra.mxu0 0.0
    %1490 = vmatprep.subr.mxu0 0.0
    %1491 = vmatpush1.msra.mxu0 0.0
    %1492 = vmatprep.subr.mxu0 0.0
    %1493 = vmatpush1.msra.mxu0 0.0
    %1494 = vmatprep.subr.mxu0 0.0
    %1495 = vmatpush1.msra.mxu0 0.0
    %1496 = vmatprep.subr.mxu0 0.0
    %1497 = vmatpush1.msra.mxu0 0.0
    %1498 = vmatprep.subr.mxu0 0.0
    %1499 = vmatpush1.msra.mxu0 0.0
    %1500 = vmatprep.subr.mxu0 0.0
    %1501 = vmatpush1.msra.mxu0 0.0
    %1502 = vmatprep.subr.mxu0 0.0
    %1503 = vmatpush1.msra.mxu0 0.0
    %1504 = vmatprep.subr.mxu0 0.0
    %1505 = vmatpush1.msra.mxu0 0.0
    %1506 = vmatprep.subr.mxu0 0.0
    %1507 = vmatpush1.msra.mxu0 0.0
    %1508 = vmatprep.subr.mxu0 0.0
    %1509 = vmatpush1.msra.mxu0 0.0
    %1510 = vmatprep.subr.mxu0 0.0
    %1511 = vmatpush1.msra.mxu0 0.0
    %1512 = vmatprep.subr.mxu0 0.0
    %1513 = vmatpush1.msra.mxu0 0.0
    %1514 = vmatprep.subr.mxu0 0.0
    %1515 = vmatpush1.msra.mxu0 0.0
    %1516 = vmatprep.subr.mxu0 0.0
    %1517 = vmatpush1.msra.mxu0 0.0
    %1518 = vmatprep.mubr.f32.mxu0 0.0
    %1519 = vmatmul.mubr.f32.gmra.mrb[0].mxu0 %v1452
    %v1520 = vpop.f32.mrb[0].mxu0
    %v1521 = vadd.f32 0.0, %v1520
    %v1522 = vpop.f32.mrb[0].mxu0
    %1523 = vdwg.mxu0
    %v1525 = vsel %vm234, %v1521, 0
    %1527 = vmatprep.subr.mxu0 0.0
    %1528 = vmatpush1.msra.mxu0 %v564
    %1529 = vmatprep.subr.mxu0 0.0
    %1530 = vmatpush1.msra.mxu0 0.0
    %1531 = vmatprep.subr.mxu0 0.0
    %1532 = vmatpush1.msra.mxu0 0.0
    %1533 = vmatprep.subr.mxu0 0.0
    %1534 = vmatpush1.msra.mxu0 0.0
    %1535 = vmatprep.subr.mxu0 0.0
    %1536 = vmatpush1.msra.mxu0 0.0
    %1537 = vmatprep.subr.mxu0 0.0
    %1538 = vmatpush1.msra.mxu0 0.0
    %1539 = vmatprep.subr.mxu0 0.0
    %1540 = vmatpush1.msra.mxu0 0.0
    %1541 = vmatprep.subr.mxu0 0.0
    %1542 = vmatpush1.msra.mxu0 0.0
    %1543 = vmatprep.subr.mxu0 0.0
    %1544 = vmatpush1.msra.mxu0 0.0
    %1545 = vmatprep.subr.mxu0 0.0
    %1546 = vmatpush1.msra.mxu0 0.0
    %1547 = vmatprep.subr.mxu0 0.0
    %1548 = vmatpush1.msra.mxu0 0.0
    %1549 = vmatprep.subr.mxu0 0.0
    %1550 = vmatpush1.msra.mxu0 0.0
    %1551 = vmatprep.subr.mxu0 0.0
    %1552 = vmatpush1.msra.mxu0 0.0
    %1553 = vmatprep.subr.mxu0 0.0
    %1554 = vmatpush1.msra.mxu0 0.0
    %1555 = vmatprep.subr.mxu0 0.0
    %1556 = vmatpush1.msra.mxu0 0.0
    %1557 = vmatprep.subr.mxu0 0.0
    %1558 = vmatpush1.msra.mxu0 0.0
    %1559 = vmatprep.subr.mxu0 0.0
    %1560 = vmatpush1.msra.mxu0 0.0
    %1561 = vmatprep.subr.mxu0 0.0
    %1562 = vmatpush1.msra.mxu0 0.0
    %1563 = vmatprep.subr.mxu0 0.0
    %1564 = vmatpush1.msra.mxu0 0.0
    %1565 = vmatprep.subr.mxu0 0.0
    %1566 = vmatpush1.msra.mxu0 0.0
    %1567 = vmatprep.subr.mxu0 0.0
    %1568 = vmatpush1.msra.mxu0 0.0
    %1569 = vmatprep.subr.mxu0 0.0
    %1570 = vmatpush1.msra.mxu0 0.0
    %1571 = vmatprep.subr.mxu0 0.0
    %1572 = vmatpush1.msra.mxu0 0.0
    %1573 = vmatprep.subr.mxu0 0.0
    %1574 = vmatpush1.msra.mxu0 0.0
    %1575 = vmatprep.subr.mxu0 0.0
    %1576 = vmatpush1.msra.mxu0 0.0
    %1577 = vmatprep.subr.mxu0 0.0
    %1578 = vmatpush1.msra.mxu0 0.0
    %1579 = vmatprep.subr.mxu0 0.0
    %1580 = vmatpush1.msra.mxu0 0.0
    %1581 = vmatprep.subr.mxu0 0.0
    %1582 = vmatpush1.msra.mxu0 0.0
    %1583 = vmatprep.subr.mxu0 0.0
    %1584 = vmatpush1.msra.mxu0 0.0
    %1585 = vmatprep.subr.mxu0 0.0
    %1586 = vmatpush1.msra.mxu0 0.0
    %1587 = vmatprep.subr.mxu0 0.0
    %1588 = vmatpush1.msra.mxu0 0.0
    %1589 = vmatprep.subr.mxu0 0.0
    %1590 = vmatpush1.msra.mxu0 0.0
    %1591 = vmatprep.mubr.f32.mxu0 0.0
    %1592 = vmatmul.mubr.f32.gmra.mrb[0].mxu0 %v1525
    %v1593 = vpop.f32.mrb[0].mxu0
    %v1594 = vadd.f32 0.0, %v1593
    %v1595 = vpop.f32.mrb[0].mxu0
    %1596 = vdwg.mxu0
    %v1598 = vsel %vm234, %v1356, 0
    %1600 = vmatprep.subr.mxu0 0.0
    %1601 = vmatpush1.msra.mxu0 %v396
    %1602 = vmatprep.subr.mxu0 0.0
    %1603 = vmatpush1.msra.mxu0 0.0
    %1604 = vmatprep.subr.mxu0 0.0
    %1605 = vmatpush1.msra.mxu0 0.0
    %1606 = vmatprep.subr.mxu0 0.0
    %1607 = vmatpush1.msra.mxu0 0.0
    %1608 = vmatprep.subr.mxu0 0.0
    %1609 = vmatpush1.msra.mxu0 0.0
    %1610 = vmatprep.subr.mxu0 0.0
    %1611 = vmatpush1.msra.mxu0 0.0
    %1612 = vmatprep.subr.mxu0 0.0
    %1613 = vmatpush1.msra.mxu0 0.0
    %1614 = vmatprep.subr.mxu0 0.0
    %1615 = vmatpush1.msra.mxu0 0.0
    %1616 = vmatprep.subr.mxu0 0.0
    %1617 = vmatpush1.msra.mxu0 0.0
    %1618 = vmatprep.subr.mxu0 0.0
    %1619 = vmatpush1.msra.mxu0 0.0
    %1620 = vmatprep.subr.mxu0 0.0
    %1621 = vmatpush1.msra.mxu0 0.0
    %1622 = vmatprep.subr.mxu0 0.0
    %1623 = vmatpush1.msra.mxu0 0.0
    %1624 = vmatprep.subr.mxu0 0.0
    %1625 = vmatpush1.msra.mxu0 0.0
    %1626 = vmatprep.subr.mxu0 0.0
    %1627 = vmatpush1.msra.mxu0 0.0
    %1628 = vmatprep.subr.mxu0 0.0
    %1629 = vmatpush1.msra.mxu0 0.0
    %1630 = vmatprep.subr.mxu0 0.0
    %1631 = vmatpush1.msra.mxu0 0.0
    %1632 = vmatprep.subr.mxu0 0.0
    %1633 = vmatpush1.msra.mxu0 0.0
    %1634 = vmatprep.subr.mxu0 0.0
    %1635 = vmatpush1.msra.mxu0 0.0
    %1636 = vmatprep.subr.mxu0 0.0
    %1637 = vmatpush1.msra.mxu0 0.0
    %1638 = vmatprep.subr.mxu0 0.0
    %1639 = vmatpush1.msra.mxu0 0.0
    %1640 = vmatprep.subr.mxu0 0.0
    %1641 = vmatpush1.msra.mxu0 0.0
    %1642 = vmatprep.subr.mxu0 0.0
    %1643 = vmatpush1.msra.mxu0 0.0
    %1644 = vmatprep.subr.mxu0 0.0
    %1645 = vmatpush1.msra.mxu0 0.0
    %1646 = vmatprep.subr.mxu0 0.0
    %1647 = vmatpush1.msra.mxu0 0.0
    %1648 = vmatprep.subr.mxu0 0.0
    %1649 = vmatpush1.msra.mxu0 0.0
    %1650 = vmatprep.subr.mxu0 0.0
    %1651 = vmatpush1.msra.mxu0 0.0
    %1652 = vmatprep.subr.mxu0 0.0
    %1653 = vmatpush1.msra.mxu0 0.0
    %1654 = vmatprep.subr.mxu0 0.0
    %1655 = vmatpush1.msra.mxu0 0.0
    %1656 = vmatprep.subr.mxu0 0.0
    %1657 = vmatpush1.msra.mxu0 0.0
    %1658 = vmatprep.subr.mxu0 0.0
    %1659 = vmatpush1.msra.mxu0 0.0
    %1660 = vmatprep.subr.mxu0 0.0
    %1661 = vmatpush1.msra.mxu0 0.0
    %1662 = vmatprep.subr.mxu0 0.0
    %1663 = vmatpush1.msra.mxu0 0.0
    %1664 = vmatprep.mubr.f32.mxu0 0.0
    %1665 = vmatmul.mubr.f32.gmra.mrb[0].mxu0 %v1598
    %v1666 = vpop.f32.mrb[0].mxu0
    %v1667 = vadd.f32 %v1594, %v1666
    %v1668 = vpop.f32.mrb[0].mxu0
    %1669 = vdwg.mxu0
    %1670 = vrot.lane.b32.xlu0 %v227, 112
    %v1671 = vpop.permute.xlu0 %1670
    %1672 = vrot.lane.b32.xlu0 %v227, 80
    %v1673 = vpop.permute.xlu0 %1672
    %v1674 = vsel %vm234, %v1671, 0
    %v1676 = vsel %vm234, %v1673, 0
    %1678 = vmatprep.subr.mxu0 0.0
    %1679 = vmatpush1.xpose.msra.mxu0 %v1676
    %1680 = vmatprep.subr.mxu0 0.0
    %1681 = vmatpush1.xpose.msra.mxu0 0.0
    %1682 = vmatprep.subr.mxu0 0.0
    %1683 = vmatpush1.xpose.msra.mxu0 0.0
    %1684 = vmatprep.subr.mxu0 0.0
    %1685 = vmatpush1.xpose.msra.mxu0 0.0
    %1686 = vmatprep.subr.mxu0 0.0
    %1687 = vmatpush1.xpose.msra.mxu0 0.0
    %1688 = vmatprep.subr.mxu0 0.0
    %1689 = vmatpush1.xpose.msra.mxu0 0.0
    %1690 = vmatprep.subr.mxu0 0.0
    %1691 = vmatpush1.xpose.msra.mxu0 0.0
    %1692 = vmatprep.subr.mxu0 0.0
    %1693 = vmatpush1.xpose.msra.mxu0 0.0
    %1694 = vmatprep.subr.mxu0 0.0
    %1695 = vmatpush1.xpose.msra.mxu0 0.0
    %1696 = vmatprep.subr.mxu0 0.0
    %1697 = vmatpush1.xpose.msra.mxu0 0.0
    %1698 = vmatprep.subr.mxu0 0.0
    %1699 = vmatpush1.xpose.msra.mxu0 0.0
    %1700 = vmatprep.subr.mxu0 0.0
    %1701 = vmatpush1.xpose.msra.mxu0 0.0
    %1702 = vmatprep.subr.mxu0 0.0
    %1703 = vmatpush1.xpose.msra.mxu0 0.0
    %1704 = vmatprep.subr.mxu0 0.0
    %1705 = vmatpush1.xpose.msra.mxu0 0.0
    %1706 = vmatprep.subr.mxu0 0.0
    %1707 = vmatpush1.xpose.msra.mxu0 0.0
    %1708 = vmatprep.subr.mxu0 0.0
    %1709 = vmatpush1.xpose.msra.mxu0 0.0
    %1710 = vmatprep.subr.mxu0 0.0
    %1711 = vmatpush1.xpose.msra.mxu0 0.0
    %1712 = vmatprep.subr.mxu0 0.0
    %1713 = vmatpush1.xpose.msra.mxu0 0.0
    %1714 = vmatprep.subr.mxu0 0.0
    %1715 = vmatpush1.xpose.msra.mxu0 0.0
    %1716 = vmatprep.subr.mxu0 0.0
    %1717 = vmatpush1.xpose.msra.mxu0 0.0
    %1718 = vmatprep.subr.mxu0 0.0
    %1719 = vmatpush1.xpose.msra.mxu0 0.0
    %1720 = vmatprep.subr.mxu0 0.0
    %1721 = vmatpush1.xpose.msra.mxu0 0.0
    %1722 = vmatprep.subr.mxu0 0.0
    %1723 = vmatpush1.xpose.msra.mxu0 0.0
    %1724 = vmatprep.subr.mxu0 0.0
    %1725 = vmatpush1.xpose.msra.mxu0 0.0
    %1726 = vmatprep.subr.mxu0 0.0
    %1727 = vmatpush1.xpose.msra.mxu0 0.0
    %1728 = vmatprep.subr.mxu0 0.0
    %1729 = vmatpush1.xpose.msra.mxu0 0.0
    %1730 = vmatprep.subr.mxu0 0.0
    %1731 = vmatpush1.xpose.msra.mxu0 0.0
    %1732 = vmatprep.subr.mxu0 0.0
    %1733 = vmatpush1.xpose.msra.mxu0 0.0
    %1734 = vmatprep.subr.mxu0 0.0
    %1735 = vmatpush1.xpose.msra.mxu0 0.0
    %1736 = vmatprep.subr.mxu0 0.0
    %1737 = vmatpush1.xpose.msra.mxu0 0.0
    %1738 = vmatprep.subr.mxu0 0.0
    %1739 = vmatpush1.xpose.msra.mxu0 0.0
    %1740 = vmatprep.subr.mxu0 0.0
    %1741 = vmatpush1.xpose.msra.mxu0 0.0
    %1742 = vmatprep.mubr.f32.mxu0 0.0
    %1743 = vmatmul.mubr.f32.gmra.mrb[0].mxu0 %v1674
    %v1744 = vpop.f32.mrb[0].mxu0
    %v1745 = vadd.f32 %v712, %v1744
    %v1746 = vpop.f32.mrb[0].mxu0
    %1747 = vdwg.mxu0
    %v1748 = vsel %vm234, %v1745, -inf
    %1749 = vmax.xlane.f32.xlu0 %v1748
    %v1750 = vpop.xlane.xlu0 %1749
    %v1751 = vsub.f32 %v1745, %v1750
    %v1752 = vmul.f32 %v1751, 1.442695
    %v1753 = vpow.pop %v1752
    %v1754 = vsel %vm234, %v1753, 0.0
    %1755 = vadd.xlane.f32.xlu0 %v1754
    %v1756 = vpop.xlane.xlu0 %1755
    %v1757 = vrcp.pop %v1756
    %v1758 = vmul.f32 %v1753, %v1757
    %1759 = vrot.lane.b32.xlu0 %v227, 48
    %v1760 = vpop.permute.xlu0 %1759
    %v1763 = vsel %vm234, %v1758, 0
    %1765 = vmatprep.subr.mxu0 0.0
    %1766 = vmatpush1.msra.mxu0 %v1760
    %1767 = vmatprep.subr.mxu0 0.0
    %1768 = vmatpush1.msra.mxu0 0.0
    %1769 = vmatprep.subr.mxu0 0.0
    %1770 = vmatpush1.msra.mxu0 0.0
    %1771 = vmatprep.subr.mxu0 0.0
    %1772 = vmatpush1.msra.mxu0 0.0
    %1773 = vmatprep.subr.mxu0 0.0
    %1774 = vmatpush1.msra.mxu0 0.0
    %1775 = vmatprep.subr.mxu0 0.0
    %1776 = vmatpush1.msra.mxu0 0.0
    %1777 = vmatprep.subr.mxu0 0.0
    %1778 = vmatpush1.msra.mxu0 0.0
    %1779 = vmatprep.subr.mxu0 0.0
    %1780 = vmatpush1.msra.mxu0 0.0
    %1781 = vmatprep.subr.mxu0 0.0
    %1782 = vmatpush1.msra.mxu0 0.0
    %1783 = vmatprep.subr.mxu0 0.0
    %1784 = vmatpush1.msra.mxu0 0.0
    %1785 = vmatprep.subr.mxu0 0.0
    %1786 = vmatpush1.msra.mxu0 0.0
    %1787 = vmatprep.subr.mxu0 0.0
    %1788 = vmatpush1.msra.mxu0 0.0
    %1789 = vmatprep.subr.mxu0 0.0
    %1790 = vmatpush1.msra.mxu0 0.0
    %1791 = vmatprep.subr.mxu0 0.0
    %1792 = vmatpush1.msra.mxu0 0.0
    %1793 = vmatprep.subr.mxu0 0.0
    %1794 = vmatpush1.msra.mxu0 0.0
    %1795 = vmatprep.subr.mxu0 0.0
    %1796 = vmatpush1.msra.mxu0 0.0
    %1797 = vmatprep.subr.mxu0 0.0
    %1798 = vmatpush1.msra.mxu0 0.0
    %1799 = vmatprep.subr.mxu0 0.0
    %1800 = vmatpush1.msra.mxu0 0.0
    %1801 = vmatprep.subr.mxu0 0.0
    %1802 = vmatpush1.msra.mxu0 0.0
    %1803 = vmatprep.subr.mxu0 0.0
    %1804 = vmatpush1.msra.mxu0 0.0
    %1805 = vmatprep.subr.mxu0 0.0
    %1806 = vmatpush1.msra.mxu0 0.0
    %1807 = vmatprep.subr.mxu0 0.0
    %1808 = vmatpush1.msra.mxu0 0.0
    %1809 = vmatprep.subr.mxu0 0.0
    %1810 = vmatpush1.msra.mxu0 0.0
    %1811 = vmatprep.subr.mxu0 0.0
    %1812 = vmatpush1.msra.mxu0 0.0
    %1813 = vmatprep.subr.mxu0 0.0
    %1814 = vmatpush1.msra.mxu0 0.0
    %1815 = vmatprep.subr.mxu0 0.0
    %1816 = vmatpush1.msra.mxu0 0.0
    %1817 = vmatprep.subr.mxu0 0.0
    %1818 = vmatpush1.msra.mxu0 0.0
    %1819 = vmatprep.subr.mxu0 0.0
    %1820 = vmatpush1.msra.mxu0 0.0
    %1821 = vmatprep.subr.mxu0 0.0
    %1822 = vmatpush1.msra.mxu0 0.0
    %1823 = vmatprep.subr.mxu0 0.0
    %1824 = vmatpush1.msra.mxu0 0.0
    %1825 = vmatprep.subr.mxu0 0.0
    %1826 = vmatpush1.msra.mxu0 0.0
    %1827 = vmatprep.subr.mxu0 0.0
    %1828 = vmatpush1.msra.mxu0 0.0
    %1829 = vmatprep.mubr.f32.mxu0 0.0
    %1830 = vmatmul.mubr.f32.gmra.mrb[0].mxu0 %v1763
    %v1831 = vpop.f32.mrb[0].mxu0
    %v1832 = vadd.f32 0.0, %v1831
    %v1833 = vpop.f32.mrb[0].mxu0
    %1834 = vdwg.mxu0
    %v1836 = vsel %vm234, %v1832, 0
    %1838 = vmatprep.subr.mxu0 0.0
    %1839 = vmatpush1.msra.mxu0 %v878
    %1840 = vmatprep.subr.mxu0 0.0
    %1841 = vmatpush1.msra.mxu0 0.0
    %1842 = vmatprep.subr.mxu0 0.0
    %1843 = vmatpush1.msra.mxu0 0.0
    %1844 = vmatprep.subr.mxu0 0.0
    %1845 = vmatpush1.msra.mxu0 0.0
    %1846 = vmatprep.subr.mxu0 0.0
    %1847 = vmatpush1.msra.mxu0 0.0
    %1848 = vmatprep.subr.mxu0 0.0
    %1849 = vmatpush1.msra.mxu0 0.0
    %1850 = vmatprep.subr.mxu0 0.0
    %1851 = vmatpush1.msra.mxu0 0.0
    %1852 = vmatprep.subr.mxu0 0.0
    %1853 = vmatpush1.msra.mxu0 0.0
    %1854 = vmatprep.subr.mxu0 0.0
    %1855 = vmatpush1.msra.mxu0 0.0
    %1856 = vmatprep.subr.mxu0 0.0
    %1857 = vmatpush1.msra.mxu0 0.0
    %1858 = vmatprep.subr.mxu0 0.0
    %1859 = vmatpush1.msra.mxu0 0.0
    %1860 = vmatprep.subr.mxu0 0.0
    %1861 = vmatpush1.msra.mxu0 0.0
    %1862 = vmatprep.subr.mxu0 0.0
    %1863 = vmatpush1.msra.mxu0 0.0
    %1864 = vmatprep.subr.mxu0 0.0
    %1865 = vmatpush1.msra.mxu0 0.0
    %1866 = vmatprep.subr.mxu0 0.0
    %1867 = vmatpush1.msra.mxu0 0.0
    %1868 = vmatprep.subr.mxu0 0.0
    %1869 = vmatpush1.msra.mxu0 0.0
    %1870 = vmatprep.subr.mxu0 0.0
    %1871 = vmatpush1.msra.mxu0 0.0
    %1872 = vmatprep.subr.mxu0 0.0
    %1873 = vmatpush1.msra.mxu0 0.0
    %1874 = vmatprep.subr.mxu0 0.0
    %1875 = vmatpush1.msra.mxu0 0.0
    %1876 = vmatprep.subr.mxu0 0.0
    %1877 = vmatpush1.msra.mxu0 0.0
    %1878 = vmatprep.subr.mxu0 0.0
    %1879 = vmatpush1.msra.mxu0 0.0
    %1880 = vmatprep.subr.mxu0 0.0
    %1881 = vmatpush1.msra.mxu0 0.0
    %1882 = vmatprep.subr.mxu0 0.0
    %1883 = vmatpush1.msra.mxu0 0.0
    %1884 = vmatprep.subr.mxu0 0.0
    %1885 = vmatpush1.msra.mxu0 0.0
    %1886 = vmatprep.subr.mxu0 0.0
    %1887 = vmatpush1.msra.mxu0 0.0
    %1888 = vmatprep.subr.mxu0 0.0
    %1889 = vmatpush1.msra.mxu0 0.0
    %1890 = vmatprep.subr.mxu0 0.0
    %1891 = vmatpush1.msra.mxu0 0.0
    %1892 = vmatprep.subr.mxu0 0.0
    %1893 = vmatpush1.msra.mxu0 0.0
    %1894 = vmatprep.subr.mxu0 0.0
    %1895 = vmatpush1.msra.mxu0 0.0
    %1896 = vmatprep.subr.mxu0 0.0
    %1897 = vmatpush1.msra.mxu0 0.0
    %1898 = vmatprep.subr.mxu0 0.0
    %1899 = vmatpush1.msra.mxu0 0.0
    %1900 = vmatprep.subr.mxu0 0.0
    %1901 = vmatpush1.msra.mxu0 0.0
    %1902 = vmatprep.mubr.f32.mxu0 0.0
    %1903 = vmatmul.mubr.f32.gmra.mrb[0].mxu0 %v1836
    %v1904 = vpop.f32.mrb[0].mxu0
    %v1905 = vadd.f32 0.0, %v1904
    %v1906 = vpop.f32.mrb[0].mxu0
    %1907 = vdwg.mxu0
    %v1908 = vadd.f32 %v1667, %v1905
    %1909 = vrot.lane.b32.xlu0 %v227, 104
    %v1910 = vpop.permute.xlu0 %1909
    %1911 = vrot.lane.b32.xlu0 %v227, 72
    %v1912 = vpop.permute.xlu0 %1911
    %v1913 = vsel %vm234, %v1910, 0
    %v1915 = vsel %vm234, %v1912, 0
    %1917 = vmatprep.subr.mxu0 0.0
    %1918 = vmatpush1.xpose.msra.mxu0 %v1915
    %1919 = vmatprep.subr.mxu0 0.0
    %1920 = vmatpush1.xpose.msra.mxu0 0.0
    %1921 = vmatprep.subr.mxu0 0.0
    %1922 = vmatpush1.xpose.msra.mxu0 0.0
    %1923 = vmatprep.subr.mxu0 0.0
    %1924 = vmatpush1.xpose.msra.mxu0 0.0
    %1925 = vmatprep.subr.mxu0 0.0
    %1926 = vmatpush1.xpose.msra.mxu0 0.0
    %1927 = vmatprep.subr.mxu0 0.0
    %1928 = vmatpush1.xpose.msra.mxu0 0.0
    %1929 = vmatprep.subr.mxu0 0.0
    %1930 = vmatpush1.xpose.msra.mxu0 0.0
    %1931 = vmatprep.subr.mxu0 0.0
    %1932 = vmatpush1.xpose.msra.mxu0 0.0
    %1933 = vmatprep.subr.mxu0 0.0
    %1934 = vmatpush1.xpose.msra.mxu0 0.0
    %1935 = vmatprep.subr.mxu0 0.0
    %1936 = vmatpush1.xpose.msra.mxu0 0.0
    %1937 = vmatprep.subr.mxu0 0.0
    %1938 = vmatpush1.xpose.msra.mxu0 0.0
    %1939 = vmatprep.subr.mxu0 0.0
    %1940 = vmatpush1.xpose.msra.mxu0 0.0
    %1941 = vmatprep.subr.mxu0 0.0
    %1942 = vmatpush1.xpose.msra.mxu0 0.0
    %1943 = vmatprep.subr.mxu0 0.0
    %1944 = vmatpush1.xpose.msra.mxu0 0.0
    %1945 = vmatprep.subr.mxu0 0.0
    %1946 = vmatpush1.xpose.msra.mxu0 0.0
    %1947 = vmatprep.subr.mxu0 0.0
    %1948 = vmatpush1.xpose.msra.mxu0 0.0
    %1949 = vmatprep.subr.mxu0 0.0
    %1950 = vmatpush1.xpose.msra.mxu0 0.0
    %1951 = vmatprep.subr.mxu0 0.0
    %1952 = vmatpush1.xpose.msra.mxu0 0.0
    %1953 = vmatprep.subr.mxu0 0.0
    %1954 = vmatpush1.xpose.msra.mxu0 0.0
    %1955 = vmatprep.subr.mxu0 0.0
    %1956 = vmatpush1.xpose.msra.mxu0 0.0
    %1957 = vmatprep.subr.mxu0 0.0
    %1958 = vmatpush1.xpose.msra.mxu0 0.0
    %1959 = vmatprep.subr.mxu0 0.0
    %1960 = vmatpush1.xpose.msra.mxu0 0.0
    %1961 = vmatprep.subr.mxu0 0.0
    %1962 = vmatpush1.xpose.msra.mxu0 0.0
    %1963 = vmatprep.subr.mxu0 0.0
    %1964 = vmatpush1.xpose.msra.mxu0 0.0
    %1965 = vmatprep.subr.mxu0 0.0
    %1966 = vmatpush1.xpose.msra.mxu0 0.0
    %1967 = vmatprep.subr.mxu0 0.0
    %1968 = vmatpush1.xpose.msra.mxu0 0.0
    %1969 = vmatprep.subr.mxu0 0.0
    %1970 = vmatpush1.xpose.msra.mxu0 0.0
    %1971 = vmatprep.subr.mxu0 0.0
    %1972 = vmatpush1.xpose.msra.mxu0 0.0
    %1973 = vmatprep.subr.mxu0 0.0
    %1974 = vmatpush1.xpose.msra.mxu0 0.0
    %1975 = vmatprep.subr.mxu0 0.0
    %1976 = vmatpush1.xpose.msra.mxu0 0.0
    %1977 = vmatprep.subr.mxu0 0.0
    %1978 = vmatpush1.xpose.msra.mxu0 0.0
    %1979 = vmatprep.subr.mxu0 0.0
    %1980 = vmatpush1.xpose.msra.mxu0 0.0
    %1981 = vmatprep.mubr.f32.mxu0 0.0
    %1982 = vmatmul.mubr.f32.gmra.mrb[0].mxu0 %v1913
    %v1983 = vpop.f32.mrb[0].mxu0
    %v1984 = vadd.f32 %v954, %v1983
    %v1985 = vpop.f32.mrb[0].mxu0
    %1986 = vdwg.mxu0
    %v1987 = vsel %vm234, %v1984, -inf
    %1988 = vmax.xlane.f32.xlu0 %v1987
    %v1989 = vpop.xlane.xlu0 %1988
    %v1990 = vsub.f32 %v1984, %v1989
    %v1991 = vmul.f32 %v1990, 1.442695
    %v1992 = vpow.pop %v1991
    %v1993 = vsel %vm234, %v1992, 0.0
    %1994 = vadd.xlane.f32.xlu0 %v1993
    %v1995 = vpop.xlane.xlu0 %1994
    %v1996 = vrcp.pop %v1995
    %v1997 = vmul.f32 %v1992, %v1996
    %1998 = vrot.lane.b32.xlu0 %v227, 40
    %v1999 = vpop.permute.xlu0 %1998
    %v2002 = vsel %vm234, %v1997, 0
    %2004 = vmatprep.subr.mxu0 0.0
    %2005 = vmatpush1.msra.mxu0 %v1999
    %2006 = vmatprep.subr.mxu0 0.0
    %2007 = vmatpush1.msra.mxu0 0.0
    %2008 = vmatprep.subr.mxu0 0.0
    %2009 = vmatpush1.msra.mxu0 0.0
    %2010 = vmatprep.subr.mxu0 0.0
    %2011 = vmatpush1.msra.mxu0 0.0
    %2012 = vmatprep.subr.mxu0 0.0
    %2013 = vmatpush1.msra.mxu0 0.0
    %2014 = vmatprep.subr.mxu0 0.0
    %2015 = vmatpush1.msra.mxu0 0.0
    %2016 = vmatprep.subr.mxu0 0.0
    %2017 = vmatpush1.msra.mxu0 0.0
    %2018 = vmatprep.subr.mxu0 0.0
    %2019 = vmatpush1.msra.mxu0 0.0
    %2020 = vmatprep.subr.mxu0 0.0
    %2021 = vmatpush1.msra.mxu0 0.0
    %2022 = vmatprep.subr.mxu0 0.0
    %2023 = vmatpush1.msra.mxu0 0.0
    %2024 = vmatprep.subr.mxu0 0.0
    %2025 = vmatpush1.msra.mxu0 0.0
    %2026 = vmatprep.subr.mxu0 0.0
    %2027 = vmatpush1.msra.mxu0 0.0
    %2028 = vmatprep.subr.mxu0 0.0
    %2029 = vmatpush1.msra.mxu0 0.0
    %2030 = vmatprep.subr.mxu0 0.0
    %2031 = vmatpush1.msra.mxu0 0.0
    %2032 = vmatprep.subr.mxu0 0.0
    %2033 = vmatpush1.msra.mxu0 0.0
    %2034 = vmatprep.subr.mxu0 0.0
    %2035 = vmatpush1.msra.mxu0 0.0
    %2036 = vmatprep.subr.mxu0 0.0
    %2037 = vmatpush1.msra.mxu0 0.0
    %2038 = vmatprep.subr.mxu0 0.0
    %2039 = vmatpush1.msra.mxu0 0.0
    %2040 = vmatprep.subr.mxu0 0.0
    %2041 = vmatpush1.msra.mxu0 0.0
    %2042 = vmatprep.subr.mxu0 0.0
    %2043 = vmatpush1.msra.mxu0 0.0
    %2044 = vmatprep.subr.mxu0 0.0
    %2045 = vmatpush1.msra.mxu0 0.0
    %2046 = vmatprep.subr.mxu0 0.0
    %2047 = vmatpush1.msra.mxu0 0.0
    %2048 = vmatprep.subr.mxu0 0.0
    %2049 = vmatpush1.msra.mxu0 0.0
    %2050 = vmatprep.subr.mxu0 0.0
    %2051 = vmatpush1.msra.mxu0 0.0
    %2052 = vmatprep.subr.mxu0 0.0
    %2053 = vmatpush1.msra.mxu0 0.0
    %2054 = vmatprep.subr.mxu0 0.0
    %2055 = vmatpush1.msra.mxu0 0.0
    %2056 = vmatprep.subr.mxu0 0.0
    %2057 = vmatpush1.msra.mxu0 0.0
    %2058 = vmatprep.subr.mxu0 0.0
    %2059 = vmatpush1.msra.mxu0 0.0
    %2060 = vmatprep.subr.mxu0 0.0
    %2061 = vmatpush1.msra.mxu0 0.0
    %2062 = vmatprep.subr.mxu0 0.0
    %2063 = vmatpush1.msra.mxu0 0.0
    %2064 = vmatprep.subr.mxu0 0.0
    %2065 = vmatpush1.msra.mxu0 0.0
    %2066 = vmatprep.subr.mxu0 0.0
    %2067 = vmatpush1.msra.mxu0 0.0
    %2068 = vmatprep.mubr.f32.mxu0 0.0
    %2069 = vmatmul.mubr.f32.gmra.mrb[0].mxu0 %v2002
    %v2070 = vpop.f32.mrb[0].mxu0
    %v2071 = vadd.f32 0.0, %v2070
    %v2072 = vpop.f32.mrb[0].mxu0
    %2073 = vdwg.mxu0
    %v2075 = vsel %vm234, %v2071, 0
    %2077 = vmatprep.subr.mxu0 0.0
    %2078 = vmatpush1.msra.mxu0 %v1120
    %2079 = vmatprep.subr.mxu0 0.0
    %2080 = vmatpush1.msra.mxu0 0.0
    %2081 = vmatprep.subr.mxu0 0.0
    %2082 = vmatpush1.msra.mxu0 0.0
    %2083 = vmatprep.subr.mxu0 0.0
    %2084 = vmatpush1.msra.mxu0 0.0
    %2085 = vmatprep.subr.mxu0 0.0
    %2086 = vmatpush1.msra.mxu0 0.0
    %2087 = vmatprep.subr.mxu0 0.0
    %2088 = vmatpush1.msra.mxu0 0.0
    %2089 = vmatprep.subr.mxu0 0.0
    %2090 = vmatpush1.msra.mxu0 0.0
    %2091 = vmatprep.subr.mxu0 0.0
    %2092 = vmatpush1.msra.mxu0 0.0
    %2093 = vmatprep.subr.mxu0 0.0
    %2094 = vmatpush1.msra.mxu0 0.0
    %2095 = vmatprep.subr.mxu0 0.0
    %2096 = vmatpush1.msra.mxu0 0.0
    %2097 = vmatprep.subr.mxu0 0.0
    %2098 = vmatpush1.msra.mxu0 0.0
    %2099 = vmatprep.subr.mxu0 0.0
    %2100 = vmatpush1.msra.mxu0 0.0
    %2101 = vmatprep.subr.mxu0 0.0
    %2102 = vmatpush1.msra.mxu0 0.0
    %2103 = vmatprep.subr.mxu0 0.0
    %2104 = vmatpush1.msra.mxu0 0.0
    %2105 = vmatprep.subr.mxu0 0.0
    %2106 = vmatpush1.msra.mxu0 0.0
    %2107 = vmatprep.subr.mxu0 0.0
    %2108 = vmatpush1.msra.mxu0 0.0
    %2109 = vmatprep.subr.mxu0 0.0
    %2110 = vmatpush1.msra.mxu0 0.0
    %2111 = vmatprep.subr.mxu0 0.0
    %2112 = vmatpush1.msra.mxu0 0.0
    %2113 = vmatprep.subr.mxu0 0.0
    %2114 = vmatpush1.msra.mxu0 0.0
    %2115 = vmatprep.subr.mxu0 0.0
    %2116 = vmatpush1.msra.mxu0 0.0
    %2117 = vmatprep.subr.mxu0 0.0
    %2118 = vmatpush1.msra.mxu0 0.0
    %2119 = vmatprep.subr.mxu0 0.0
    %2120 = vmatpush1.msra.mxu0 0.0
    %2121 = vmatprep.subr.mxu0 0.0
    %2122 = vmatpush1.msra.mxu0 0.0
    %2123 = vmatprep.subr.mxu0 0.0
    %2124 = vmatpush1.msra.mxu0 0.0
    %2125 = vmatprep.subr.mxu0 0.0
    %2126 = vmatpush1.msra.mxu0 0.0
    %2127 = vmatprep.subr.mxu0 0.0
    %2128 = vmatpush1.msra.mxu0 0.0
    %2129 = vmatprep.subr.mxu0 0.0
    %2130 = vmatpush1.msra.mxu0 0.0
    %2131 = vmatprep.subr.mxu0 0.0
    %2132 = vmatpush1.msra.mxu0 0.0
    %2133 = vmatprep.subr.mxu0 0.0
    %2134 = vmatpush1.msra.mxu0 0.0
    %2135 = vmatprep.subr.mxu0 0.0
    %2136 = vmatpush1.msra.mxu0 0.0
    %2137 = vmatprep.subr.mxu0 0.0
    %2138 = vmatpush1.msra.mxu0 0.0
    %2139 = vmatprep.subr.mxu0 0.0
    %2140 = vmatpush1.msra.mxu0 0.0
    %2141 = vmatprep.mubr.f32.mxu0 0.0
    %2142 = vmatmul.mubr.f32.gmra.mrb[0].mxu0 %v2075
    %v2143 = vpop.f32.mrb[0].mxu0
    %v2144 = vadd.f32 0.0, %v2143
    %v2145 = vpop.f32.mrb[0].mxu0
    %2146 = vdwg.mxu0
    %v2147 = vadd.f32 %v1908, %v2144
    %v2148 = vld [vmem:[%s9] sm:$0x1]
    %v2150 = vlaneseq
    %v2151 = vshrl.u32 %v2150, 7
    %v2152 = vsub.s32 0, %v2151
    %v2153 = vrot.slane %v2148, %v2152
    %v2155 = vadd.f32 %v1194, %v2153
    %v2156 = vadd.f32 %v2147, %v2153
    %v2157 = vadd.f32 %v76, %v2155
    %v2158 = vadd.f32 %v77, %v2156
    %v2159 = vld [vmem:[%s4] sm:$0x1]
    %v2160 = vld [vmem:[%s5] sm:$0x1]
    %v2161 = vsel %vm80, %v2157, 0.0
    %2162 = vadd.xlane.f32.xlu0 %v2161
    %v2163 = vpop.xlane.xlu0 %2162
    %v2164 = vsel %vm80, %v2158, 0.0
    %2165 = vadd.xlane.f32.xlu0 %v2164
    %v2166 = vpop.xlane.xlu0 %2165
    %v2167 = vmul.f32 %v2163, %v87
    %v2168 = vmul.f32 %v2166, %v87
    %v2169 = vsub.f32 %v2157, %v2167
    %v2170 = vsub.f32 %v2158, %v2168
    %v2171 = vmul.f32 %v2169, %v2169
    %v2172 = vmul.f32 %v2170, %v2170
    %v2173 = vsel %vm80, %v2171, 0.0
    %2174 = vadd.xlane.f32.xlu0 %v2173
    %v2175 = vpop.xlane.xlu0 %2174
    %v2176 = vsel %vm80, %v2172, 0.0
    %2177 = vadd.xlane.f32.xlu0 %v2176
    %v2178 = vpop.xlane.xlu0 %2177
    %v2179 = vmul.f32 %v2175, 0.032258064
    %v2180 = vmul.f32 %v2178, 0.032258064
    %v2182 = vlaneseq
    %v2183 = vshrl.u32 %v2182, 7
    %v2184 = vsub.s32 0, %v2183
    %v2185 = vrot.slane %v2159, %v2184
    %v2187 = vmul.f32 %v2185, %v2169
    %v2188 = vmul.f32 %v2185, %v2170
    %v2189 = vrsqrt.pop %v2179
    %v2190 = vmul.f32 %v2179, %v2189
    %vm2191 = vcmp.eq.f32.partialorder %v2179, inf
    %v2192 = vsel %vm2191, %v2179, %v2190
    %vm2193 = vcmp.eq.f32.partialorder %v2179, 0.0
    %v2194 = vand.u32 %v2179, 2147483648
    %v2195 = vsel %vm2193, %v2194, %v2192
    %v2196 = vrsqrt.pop %v2180
    %v2197 = vmul.f32 %v2180, %v2196
    %vm2198 = vcmp.eq.f32.partialorder %v2180, inf
    %v2199 = vsel %vm2198, %v2180, %v2197
    %vm2200 = vcmp.eq.f32.partialorder %v2180, 0.0
    %v2201 = vand.u32 %v2180, 2147483648
    %v2202 = vsel %vm2200, %v2201, %v2199
    %v2203 = vadd.f32 %v2195, 1000000.0
    %v2204 = vadd.f32 %v2202, 1000000.0
    %v2205 = vrcp.pop %v2203
    %v2206 = vmul.f32 %v2187, %v2205
    %v2207 = vrcp.pop %v2204
    %v2208 = vmul.f32 %v2188, %v2207
    %v2210 = vlaneseq
    %v2211 = vshrl.u32 %v2210, 7
    %v2212 = vsub.s32 0, %v2211
    %v2213 = vrot.slane %v2160, %v2212
    %v2215 = vadd.f32 %v2206, %v2213
    %v2216 = vadd.f32 %v2208, %v2213
    %v2217 = vld [vmem:[#allocation5] sm:$0xff]
    %v2218 = vld [vmem:[#allocation5 + $0x8] sm:$0xff]
    %v2219 = vld [vmem:[#allocation5 + $0x10] sm:$0xff]
    %v2220 = vld [vmem:[#allocation5 + $0x18] sm:$0xff]
    %v2221 = vld [vmem:[%s11] sm:$0x1]
    %v2223 = vlaneseq
    %v2224 = vshrl.u32 %v2223, 7
    %v2225 = vsub.s32 0, %v2224
    %v2226 = vrot.slane %v2221, %v2225
    %v2229 = vsel %vm80, %v2215, 0
    %v2232 = vsel %vm80, %v2216, 0
    %2234 = vmatprep.subr.mxu0 0.0
    %2235 = vmatpush1.msra.mxu0 %v2217
    %2236 = vmatprep.subr.mxu0 0.0
    %2237 = vmatpush1.msra.mxu0 %v2218
    %2238 = vmatprep.subr.mxu0 0.0
    %2239 = vmatpush1.msra.mxu0 %v2219
    %2240 = vmatprep.subr.mxu0 0.0
    %2241 = vmatpush1.msra.mxu0 %v2220
    %2242 = vmatprep.subr.mxu0 0.0
    %2243 = vmatpush1.msra.mxu0 0.0
    %2244 = vmatprep.subr.mxu0 0.0
    %2245 = vmatpush1.msra.mxu0 0.0
    %2246 = vmatprep.subr.mxu0 0.0
    %2247 = vmatpush1.msra.mxu0 0.0
    %2248 = vmatprep.subr.mxu0 0.0
    %2249 = vmatpush1.msra.mxu0 0.0
    %2250 = vmatprep.subr.mxu0 0.0
    %2251 = vmatpush1.msra.mxu0 0.0
    %2252 = vmatprep.subr.mxu0 0.0
    %2253 = vmatpush1.msra.mxu0 0.0
    %2254 = vmatprep.subr.mxu0 0.0
    %2255 = vmatpush1.msra.mxu0 0.0
    %2256 = vmatprep.subr.mxu0 0.0
    %2257 = vmatpush1.msra.mxu0 0.0
    %2258 = vmatprep.subr.mxu0 0.0
    %2259 = vmatpush1.msra.mxu0 0.0
    %2260 = vmatprep.subr.mxu0 0.0
    %2261 = vmatpush1.msra.mxu0 0.0
    %2262 = vmatprep.subr.mxu0 0.0
    %2263 = vmatpush1.msra.mxu0 0.0
    %2264 = vmatprep.subr.mxu0 0.0
    %2265 = vmatpush1.msra.mxu0 0.0
    %2266 = vmatprep.subr.mxu0 0.0
    %2267 = vmatpush1.msra.mxu0 0.0
    %2268 = vmatprep.subr.mxu0 0.0
    %2269 = vmatpush1.msra.mxu0 0.0
    %2270 = vmatprep.subr.mxu0 0.0
    %2271 = vmatpush1.msra.mxu0 0.0
    %2272 = vmatprep.subr.mxu0 0.0
    %2273 = vmatpush1.msra.mxu0 0.0
    %2274 = vmatprep.subr.mxu0 0.0
    %2275 = vmatpush1.msra.mxu0 0.0
    %2276 = vmatprep.subr.mxu0 0.0
    %2277 = vmatpush1.msra.mxu0 0.0
    %2278 = vmatprep.subr.mxu0 0.0
    %2279 = vmatpush1.msra.mxu0 0.0
    %2280 = vmatprep.subr.mxu0 0.0
    %2281 = vmatpush1.msra.mxu0 0.0
    %2282 = vmatprep.subr.mxu0 0.0
    %2283 = vmatpush1.msra.mxu0 0.0
    %2284 = vmatprep.subr.mxu0 0.0
    %2285 = vmatpush1.msra.mxu0 0.0
    %2286 = vmatprep.subr.mxu0 0.0
    %2287 = vmatpush1.msra.mxu0 0.0
    %2288 = vmatprep.subr.mxu0 0.0
    %2289 = vmatpush1.msra.mxu0 0.0
    %2290 = vmatprep.subr.mxu0 0.0
    %2291 = vmatpush1.msra.mxu0 0.0
    %2292 = vmatprep.subr.mxu0 0.0
    %2293 = vmatpush1.msra.mxu0 0.0
    %2294 = vmatprep.subr.mxu0 0.0
    %2295 = vmatpush1.msra.mxu0 0.0
    %2296 = vmatprep.subr.mxu0 0.0
    %2297 = vmatpush1.msra.mxu0 0.0
    %2298 = vmatprep.mubr.f32.mxu0 0.0
    %2299 = vmatmul.mubr.f32.gmra.mrb[0].mxu0 %v2229
    %v2300 = vpop.f32.mrb[0].mxu0
    %v2301 = vadd.f32 %v2226, %v2300
    %v2302 = vpop.f32.mrb[0].mxu0
    %2303 = vmatprep.mubr.f32.mxu0 0.0
    %2304 = vmatmul.mubr.f32.gmra.mrb[0].mxu0 %v2232
    %v2305 = vpop.f32.mrb[0].mxu0
    %v2306 = vadd.f32 %v2226, %v2305
    %v2307 = vpop.f32.mrb[0].mxu0
    %2308 = vdwg.mxu0
    %v2309 = vmax.f32 %v2301, 0.0
    %v2310 = vmax.f32 %v2306, 0.0
    %v2311 = vld [vmem:[%s12] sm:$0xff]
    %v2312 = vld [vmem:[%s12 + $0x8] sm:$0xff]
    %v2313 = vld [vmem:[%s12 + $0x10] sm:$0xff]
    %v2314 = vld [vmem:[%s12 + $0x18] sm:$0xff]
    %v2315 = vld [vmem:[%s12 + $0x20] sm:$0xff]
    %v2316 = vld [vmem:[%s12 + $0x28] sm:$0xff]
    %v2317 = vld [vmem:[%s12 + $0x30] sm:$0xff]
    %v2318 = vld [vmem:[%s12 + $0x38] sm:$0xff]
    %v2319 = vld [vmem:[%s13] sm:$0x1]
    %v2321 = vlaneseq
    %v2322 = vshrl.u32 %v2321, 7
    %v2323 = vsub.s32 0, %v2322
    %v2324 = vrot.slane %v2319, %v2323
    %vm2326 = vcmask 523264
    %v2328 = vsel %vm2326, %v2309, 0
    %v2331 = vsel %vm2326, %v2310, 0
    %2333 = vmatprep.subr.mxu0 0.0
    %2334 = vmatpush1.msra.mxu0 %v2311
    %2335 = vmatprep.subr.mxu0 0.0
    %2336 = vmatpush1.msra.mxu0 %v2312
    %2337 = vmatprep.subr.mxu0 0.0
    %2338 = vmatpush1.msra.mxu0 %v2313
    %2339 = vmatprep.subr.mxu0 0.0
    %2340 = vmatpush1.msra.mxu0 %v2314
    %2341 = vmatprep.subr.mxu0 0.0
    %2342 = vmatpush1.msra.mxu0 %v2315
    %2343 = vmatprep.subr.mxu0 0.0
    %2344 = vmatpush1.msra.mxu0 %v2316
    %2345 = vmatprep.subr.mxu0 0.0
    %2346 = vmatpush1.msra.mxu0 %v2317
    %2347 = vmatprep.subr.mxu0 0.0
    %2348 = vmatpush1.msra.mxu0 %v2318
    %2349 = vmatprep.subr.mxu0 0.0
    %2350 = vmatpush1.msra.mxu0 0.0
    %2351 = vmatprep.subr.mxu0 0.0
    %2352 = vmatpush1.msra.mxu0 0.0
    %2353 = vmatprep.subr.mxu0 0.0
    %2354 = vmatpush1.msra.mxu0 0.0
    %2355 = vmatprep.subr.mxu0 0.0
    %2356 = vmatpush1.msra.mxu0 0.0
    %2357 = vmatprep.subr.mxu0 0.0
    %2358 = vmatpush1.msra.mxu0 0.0
    %2359 = vmatprep.subr.mxu0 0.0
    %2360 = vmatpush1.msra.mxu0 0.0
    %2361 = vmatprep.subr.mxu0 0.0
    %2362 = vmatpush1.msra.mxu0 0.0
    %2363 = vmatprep.subr.mxu0 0.0
    %2364 = vmatpush1.msra.mxu0 0.0
    %2365 = vmatprep.subr.mxu0 0.0
    %2366 = vmatpush1.msra.mxu0 0.0
    %2367 = vmatprep.subr.mxu0 0.0
    %2368 = vmatpush1.msra.mxu0 0.0
    %2369 = vmatprep.subr.mxu0 0.0
    %2370 = vmatpush1.msra.mxu0 0.0
    %2371 = vmatprep.subr.mxu0 0.0
    %2372 = vmatpush1.msra.mxu0 0.0
    %2373 = vmatprep.subr.mxu0 0.0
    %2374 = vmatpush1.msra.mxu0 0.0
    %2375 = vmatprep.subr.mxu0 0.0
    %2376 = vmatpush1.msra.mxu0 0.0
    %2377 = vmatprep.subr.mxu0 0.0
    %2378 = vmatpush1.msra.mxu0 0.0
    %2379 = vmatprep.subr.mxu0 0.0
    %2380 = vmatpush1.msra.mxu0 0.0
    %2381 = vmatprep.subr.mxu0 0.0
    %2382 = vmatpush1.msra.mxu0 0.0
    %2383 = vmatprep.subr.mxu0 0.0
    %2384 = vmatpush1.msra.mxu0 0.0
    %2385 = vmatprep.subr.mxu0 0.0
    %2386 = vmatpush1.msra.mxu0 0.0
    %2387 = vmatprep.subr.mxu0 0.0
    %2388 = vmatpush1.msra.mxu0 0.0
    %2389 = vmatprep.subr.mxu0 0.0
    %2390 = vmatpush1.msra.mxu0 0.0
    %2391 = vmatprep.subr.mxu0 0.0
    %2392 = vmatpush1.msra.mxu0 0.0
    %2393 = vmatprep.subr.mxu0 0.0
    %2394 = vmatpush1.msra.mxu0 0.0
    %2395 = vmatprep.subr.mxu0 0.0
    %2396 = vmatpush1.msra.mxu0 0.0
    %2397 = vmatprep.mubr.f32.mxu0 0.0
    %2398 = vmatmul.mubr.f32.gmra.mrb[0].mxu0 %v2328
    %v2399 = vpop.f32.mrb[0].mxu0
    %v2400 = vadd.f32 %v2324, %v2399
    %v2401 = vpop.f32.mrb[0].mxu0
    %2402 = vmatprep.mubr.f32.mxu0 0.0
    %2403 = vmatmul.mubr.f32.gmra.mrb[0].mxu0 %v2331
    %v2404 = vpop.f32.mrb[0].mxu0
    %v2405 = vadd.f32 %v2324, %v2404
    %v2406 = vpop.f32.mrb[0].mxu0
    %2407 = vdwg.mxu0
    %v2408 = vadd.f32 %v2157, %v2400
    %v2409 = vadd.f32 %v2158, %v2405
    %2410 = vst.msk [vmem:[#allocation7] sm:$0xff] %vm80, %v2408
    %2411 = vst.msk [vmem:[#allocation7 + $0x8] sm:$0xff] %vm80, %v2409
    // Predicated region
    $region66: #{tpu_custom_call.1} parent=1 // pred_check
      _
    $region67: #{tpu_custom_call.1} parent=1 // pred_check_branch
      %2413 = sbr.rel (0) target = $region69
    $region68: #{tpu_custom_call.1} parent=1 // pred_region
      %s2415 = ssub.s32 256, 256
      %2416 = vsyncadd [#allocation4], %s2415
      %s2417 = sshll.u32 [#allocation7], 4
      %s2418 = int_to_ptr.vmem [resolvable:$true] %s2417
      %2423 = dma.vmem_to_hbm [thread:$0]  %s2418, 256, %s14, [#allocation4], 128, 128, 8
    $region69: #{tpu_custom_call.1} parent=1 // pred_fallthru
      _
    // Predicated region
    $region70: #{tpu_custom_call.1} parent=1 // pred_check
      _
    $region71: #{tpu_custom_call.1} parent=1 // pred_check_branch
      %2425 = sbr.rel (0) target = $region73
    $region72: #{tpu_custom_call.1} parent=1 // pred_region
      %2426 = dma.done [#allocation4], 256
    $region73: #{tpu_custom_call.1} parent=1 // pred_fallthru
      _
    %2427 = vsyncpa [#allocation3], 1
    %2428 = vsyncpa [#allocation6], 1
    %2429 = vsyncpa [#allocation4], 1

</llo_original>
